<compile_context>
chip_gen: v7x
topology: tpu7x:2x2x1
jax: 0.10.0
libtpu: 0.0.40
codegen_flags: <defaults>
</compile_context>

<pallas_src>
import numpy as np
import jax
import jax.numpy as jnp
from jax import lax
from jax.experimental import pallas as pl
from jax.experimental.pallas import tpu as pltpu


def _round_up(x, m):
    return ((x + m - 1) // m) * m


def _vmem_capacity_bytes():
    try:
        info = pltpu.get_tpu_info()
        cap = getattr(info, "vmem_capacity_bytes", None)
        if cap:
            return int(cap)
    except Exception:
        pass
    return 64 << 20  # conservative: v7x per-TensorCore VMEM


# ----------------------------------------------------------------------------
# Pallas kernel
# ----------------------------------------------------------------------------
def _make_kernel(tile_n, chunk, nd_pad):
    nd2 = nd_pad // 2
    n_chunks = tile_n // chunk

    def kernel(gid_ref, valid_ref, tok_ref,   # scalar prefetch (SMEM)
               e_hbm,                         # (ntoken, nd2) uint32, stays in HBM
               wt_ref,                        # (1, nd_pad, tn) bf16, K rows = [even; odd]
               bias_ref,                      # (1, tn) f32 head-cluster bias
               out_ref,                       # (tile_n, tn) bf16
               gbuf, gsem):                   # VMEM (tile_n, nd2) u32, DMA sems (2,)
        g = pl.program_id(0)                  # token tile (cluster-homogeneous)
        j = pl.program_id(1)                  # output-column block
        gid = gid_ref[g]                      # this tile's cluster id
        nvalid = valid_ref[g]                 # live rows in this tile
        tile_base = g * tile_n

        def row_copy(row, parity):
            tok = tok_ref[tile_base + row]
            return pltpu.make_async_copy(
                e_hbm.at[pl.ds(tok, 1)], gbuf.at[pl.ds(row, 1)], gsem.at[parity])

        def rows_in_chunk(c):
            return jnp.clip(nvalid - c * chunk, 0, chunk)

        def start_chunk(c):
            def body(r, carry):
                row_copy(c * chunk + r, c % 2).start()
                return carry
            lax.fori_loop(0, rows_in_chunk(c), body, 0)

        def wait_chunk(c):
            def body(r, carry):
                row_copy(c * chunk + r, c % 2).wait()
                return carry
            lax.fori_loop(0, rows_in_chunk(c), body, 0)

        def matmul_rows(packed):
            # word = even-col bf16 bits | (odd-col bf16 bits << 16).  A bf16
            # value equals the f32 whose top 16 bits are that pattern, so the
            # unpack is exact; MXU runs in bf16 with f32 accumulation.
            lo = pltpu.bitcast(packed << 16, jnp.float32).astype(jnp.bfloat16)
            hi = pltpu.bitcast((packed >> 16) << 16, jnp.float32).astype(jnp.bfloat16)
            return (jnp.dot(lo, wt_ref[0, :nd2, :], preferred_element_type=jnp.float32)
                    + jnp.dot(hi, wt_ref[0, nd2:, :], preferred_element_type=jnp.float32))

        def store_rows(row0, y):
            # Only the head cluster's Linear has a bias (tail Linears are
            # bias-free) -> pl.when-gated add, tail tiles store directly.
            @pl.when(gid == 0)
            def _():
                out_ref[row0:row0 + y.shape[0], :] = (
                    y + bias_ref[...]).astype(out_ref.dtype)

            @pl.when(gid != 0)
            def _():
                out_ref[row0:row0 + y.shape[0], :] = y.astype(out_ref.dtype)

        @pl.when(j == 0)
        def _gather_and_first_block():
            # In-kernel row gather (no grouped-embedding HBM round trip),
            # chunk-double-buffered against this tile's first N-block matmuls.
            start_chunk(0)
            for c in range(n_chunks):
                if c + 1 < n_chunks:
                    start_chunk(c + 1)        # overlap next gather with this matmul

                @pl.when(rows_in_chunk(c) > 0)  # dead rows: no DMA wait, no MXU
                def _():
                    wait_chunk(c)
                    store_rows(c * chunk,
                               matmul_rows(gbuf[c * chunk:(c + 1) * chunk, :]))

        @pl.when(jnp.logical_and(j > 0, nvalid > 0))
        def _remaining_blocks():
            # Embeddings for this tile are already resident in gbuf.
            store_rows(0, matmul_rows(gbuf[...]))

    return kernel


# ----------------------------------------------------------------------------
# Parameter init (deterministic, mirrors the nn.Module __init__ shapes/inits).
# ----------------------------------------------------------------------------
def init_adaptive_input_params(key, ndim, ntoken, cutoffs, div_value=4):
    cutoffs_full = [0] + list(cutoffs) + [ntoken]
    assert all(a < b for a, b in zip(cutoffs_full[:-1], cutoffs_full[1:])), \
        "cutoffs must be strictly increasing and < ntoken"
    num_clusters = len(cutoffs_full) - 1
    keys = jax.random.split(key, 2 * num_clusters + 1)

    emb_tables, lin_weights = [], []
    for i in range(num_clusters):
        lo, hi = cutoffs_full[i], cutoffs_full[i + 1]
        size = hi - lo
        dim = ndim if i == 0 else ndim // (div_value ** i)
        # Embedding: normal(0, dim ** -0.5)
        emb = jax.random.normal(keys[2 * i], (size, dim), jnp.float32) * dim ** -0.5
        # Linear(dim, ndim): xavier_uniform weight of shape (ndim, dim)
        bound = (6.0 / (dim + ndim)) ** 0.5
        w = jax.random.uniform(keys[2 * i + 1], (ndim, dim), jnp.float32,
                               -bound, bound)
        emb_tables.append(emb)
        lin_weights.append(w)

    # Head Linear keeps its default bias: U(-1/sqrt(fan_in), +1/sqrt(fan_in)).
    bb = ndim ** -0.5
    head_bias = jax.random.uniform(keys[-1], (ndim,), jnp.float32, -bb, bb)

    return dict(emb_tables=emb_tables, lin_weights=lin_weights,
                head_bias=head_bias, cutoffs_full=cutoffs_full)


# ----------------------------------------------------------------------------
# Forward wrapper (glue + pallas_call)
# ----------------------------------------------------------------------------
def adaptive_input_forward(tokens, params, ndim, tile_n=512, chunk=128):
    cutoffs_full = params["cutoffs_full"]
    C = len(cutoffs_full) - 1
    nd_pad = _round_up(max(ndim, 128), 128)           # lane-dense kernel width
    nd2 = nd_pad // 2
    assert tile_n % chunk == 0 and chunk % 16 == 0

    # N (output-column) tile: full width when modest, else 256+-wide blocks so
    # the double-buffered weight block fits v7x's 64 MiB VMEM.
    if nd_pad <= 1024:
        tile_nd = nd_pad
    else:
        tile_nd = next(t for t in (1024, 512, 256, 128) if nd_pad % t == 0)
    nj = nd_pad // tile_nd

    # --- glue: pack params (bf16 precision, done per call here; a real model
    #     would cache these) ---------------------------------------------------
    # Embedding table: concat clusters, zero-pad K to nd_pad, round to bf16,
    # then pack adjacent column pairs into one uint32 so the in-kernel row
    # gather is a 32-bit-granular DMA.
    e_f32 = jnp.concatenate(
        [jnp.pad(t, ((0, 0), (0, nd_pad - t.shape[1]))) for t in params["emb_tables"]],
        axis=0)                                                     # (ntoken, nd_pad)
    e_bf = e_f32.astype(jnp.bfloat16).astype(jnp.float32)           # exact bf16 values
    bits = jax.lax.bitcast_convert_type(e_bf, jnp.uint32) >> 16     # bf16 bit pattern
    e_packed = bits[:, 0::2] | (bits[:, 1::2] << 16)                # (ntoken, nd2) u32

    # Projection weights: W^T zero-padded to (nd_pad, nd_pad); K rows permuted
    # to [even cols ; odd cols] to match the kernel's unpack order.
    perm = np.concatenate([np.arange(0, nd_pad, 2), np.arange(1, nd_pad, 2)])
    wt = jnp.stack([
        jnp.zeros((nd_pad, nd_pad), jnp.float32)
           .at[:w.shape[1], :ndim].set(w.T)[perm, :]
        for w in params["lin_weights"]]).astype(jnp.bfloat16)       # (C, nd_pad, nd_pad)

    bias = jnp.zeros((1, nd_pad), jnp.float32).at[0, :ndim].set(params["head_bias"])

    # --- glue: group tokens by cluster, each cluster padded to tile_n ---------
    orig_shape = tokens.shape
    flat = tokens.reshape(-1).astype(jnp.int32)
    n = flat.shape[0]
    num_grid = -(-n // tile_n) + (C - 1)        # static upper bound on tile count
    total_rows = num_grid * tile_n

    bounds = jnp.asarray(cutoffs_full[1:-1], jnp.int32)             # (C-1,)
    cid = jnp.sum(flat[:, None] >= bounds[None, :], axis=1).astype(jnp.int32)

    counts = jnp.sum(cid[None, :] == jnp.arange(C, dtype=jnp.int32)[:, None], axis=1)
    start = jnp.concatenate([jnp.zeros((1,), counts.dtype), jnp.cumsum(counts)[:-1]])
    tiles_per_c = (counts + tile_n - 1) // tile_n
    padded_start = jnp.concatenate([jnp.zeros((1,), counts.dtype),
                                    jnp.cumsum(tiles_per_c * tile_n)[:-1]])

    order = jnp.argsort(cid, stable=True)
    rank = jnp.zeros((n,), jnp.int32).at[order].set(jnp.arange(n, dtype=jnp.int32))
    dest = padded_start[cid] + (rank - start[cid])    # grouped row of each token

    grouped_tok = jnp.zeros((total_rows,), jnp.int32).at[dest].set(flat)

    tile_cum = jnp.cumsum(tiles_per_c)
    g_idx = jnp.arange(num_grid, dtype=jnp.int32)
    tile_gid = jnp.minimum(
        jnp.sum((g_idx[:, None] >= tile_cum[None, :]).astype(jnp.int32), axis=1),
        C - 1).astype(jnp.int32)                      # cluster id of each tile
    tile_start = jnp.concatenate([jnp.zeros((1,), tile_cum.dtype), tile_cum[:-1]])
    local_tile = g_idx - tile_start[tile_gid]
    tile_valid = jnp.clip(counts[tile_gid] - local_tile * tile_n,
                          0, tile_n).astype(jnp.int32)              # live rows per tile

    # --- generation-gated VMEM budget -----------------------------------------
    est = (2 * nd_pad * tile_nd * 2        # weight block (bf16, double-buffered)
           + 2 * tile_n * tile_nd * 2      # out block (bf16, double-buffered)
           + tile_n * nd2 * 4              # gather scratch (u32)
           + 2 * tile_nd * 4)              # bias block
    cap = _vmem_capacity_bytes()
    vmem_limit = int(min(max(4 * est, 32 << 20), int(0.85 * cap)))

    kernel = _make_kernel(tile_n, chunk, nd_pad)
    out_g = pl.pallas_call(
        kernel,
        out_shape=jax.ShapeDtypeStruct((total_rows, nd_pad), jnp.bfloat16),
        grid_spec=pltpu.PrefetchScalarGridSpec(
            num_scalar_prefetch=3,          # tile_gid, tile_valid, grouped_tok -> SMEM
            grid=(num_grid, nj),
            in_specs=[
                pl.BlockSpec(memory_space=pl.ANY),                  # packed emb table (HBM)
                pl.BlockSpec((1, nd_pad, tile_nd),
                             lambda g, j, gid, valid, tok: (gid[g], 0, j)),
                pl.BlockSpec((1, tile_nd),
                             lambda g, j, gid, valid, tok: (0, j)),
            ],
            out_specs=pl.BlockSpec((tile_n, tile_nd),
                                   lambda g, j, gid, valid, tok: (g, j)),
            scratch_shapes=[
                pltpu.VMEM((tile_n, nd2), jnp.uint32),              # gathered rows
                pltpu.SemaphoreType.DMA((2,)),                      # per-chunk-parity sems
            ]),
        compiler_params=pltpu.CompilerParams(
            dimension_semantics=("parallel", "arbitrary"),  # disjoint token tiles
            vmem_limit_bytes=vmem_limit),
    )(tile_gid, tile_valid, grouped_tok, e_packed, wt, bias)

    # Ungroup, trim lane padding, and return f32 as the PyTorch module does.
    out = out_g[dest][:, :ndim].astype(jnp.float32)
    return out.reshape(orig_shape + (ndim,))


# ----------------------------------------------------------------------------
# Pure-JAX reference of the PyTorch forward (bf16 MXU inputs, f32 accumulation)
# for correctness checking only.  The kernel additionally rounds its output to
# bf16 before the final f32 cast, hence the loose-ish tolerance below.
# ----------------------------------------------------------------------------
def reference_forward(tokens, params, ndim, mxu_dtype=jnp.bfloat16):
    cutoffs_full = params["cutoffs_full"]
    C = len(cutoffs_full) - 1
    out = jnp.zeros(tokens.shape + (ndim,), jnp.float32)
    for i in range(C):
        lo, hi = cutoffs_full[i], cutoffs_full[i + 1]
        mask = (tokens >= lo) & (tokens < hi)
        idx = jnp.clip(tokens - lo, 0, params["emb_tables"][i].shape[0] - 1)
        e = params["emb_tables"][i][idx].astype(mxu_dtype)        # (..., dim_i)
        w = params["lin_weights"][i].astype(mxu_dtype)            # (ndim, dim_i)
        y = jnp.dot(e, w.T, preferred_element_type=jnp.float32)   # (..., ndim)
        if i == 0:
            y = y + params["head_bias"]
        out = jnp.where(mask[..., None], y, out)
    return out


if __name__ == "__main__":
    ndim, ntoken = 32, 32
    cutoffs = [8, 16]            # self.cutoffs -> [8, 16, 32]; 3 clusters
    batch, seq = 2, 8

    key = jax.random.PRNGKey(0)
    k_param, k_tok = jax.random.split(key)
    params = init_adaptive_input_params(k_param, ndim, ntoken, cutoffs,
                                        div_value=4)
    tokens = jax.random.randint(k_tok, (batch, seq), 0, ntoken, jnp.int32)

    out = adaptive_input_forward(tokens, params, ndim, tile_n=256, chunk=128)
    out = jax.block_until_ready(out)

    ref = reference_forward(tokens, params, ndim)
    assert out.shape == (batch, seq, ndim) and out.dtype == jnp.float32
    assert np.allclose(np.asarray(out), np.asarray(ref), atol=1e-2, rtol=1e-2), \
        "Pallas output mismatch vs reference"
    print("KERNEL_OK")
</pallas_src>

<mosaic_0001>
module attributes {stable_mosaic.version = 11 : i64} {
  func.func @kernel(%arg0: i32, %arg1: i32, %arg2: memref<3xi32, #tpu.memory_space<smem>>, %arg3: memref<3xi32, #tpu.memory_space<smem>>, %arg4: memref<768xi32, #tpu.memory_space<smem>>, %arg5: memref<32x64xi32, #tpu.memory_space<any>>, %arg6: memref<1x128x128xbf16, #tpu.memory_space<vmem>>, %arg7: memref<1x128xf32, #tpu.memory_space<vmem>>, %arg8: memref<256x128xbf16, #tpu.memory_space<vmem>>, %arg9: memref<256x64xi32, #tpu.memory_space<vmem>>, %arg10: memref<2x!tpu.dma_semaphore, #tpu.memory_space<semaphore_mem>>) attributes {dimension_semantics = [#tpu.dimension_semantics<parallel>, #tpu.dimension_semantics<arbitrary>], iteration_bounds = array<i64: 3, 1>, scalar_prefetch = 3 : i64, scratch_operands = 2 : i64, tpu.core_type = #tpu.core_type<tc>, window_params = [{}, {transform_indices = @transform_1, window_bounds = array<i64: 1, 128, 128>}, {transform_indices = @transform_2, window_bounds = array<i64: 1, 128>}, {transform_indices = @transform_3, window_bounds = array<i64: 256, 128>}]} {
    %0 = arith.index_cast %arg0 : i32 to index
    %1 = memref.load %arg2[%0] : memref<3xi32, #tpu.memory_space<smem>>
    %2 = arith.index_cast %arg0 : i32 to index
    %3 = memref.load %arg3[%2] : memref<3xi32, #tpu.memory_space<smem>>
    %c256_i32 = arith.constant 256 : i32
    %4 = arith.muli %arg0, %c256_i32 : i32
    %c0_i32 = arith.constant 0 : i32
    %5 = arith.cmpi eq, %arg1, %c0_i32 : i32
    %6 = arith.extui %5 : i1 to i32
    %c0_i32_0 = arith.constant 0 : i32
    %7 = arith.cmpi ne, %6, %c0_i32_0 : i32
    scf.if %7 {
      %c0_i32_4 = arith.constant 0 : i32
      %13 = arith.subi %3, %c0_i32_4 : i32
      %c0_i32_5 = arith.constant 0 : i32
      %c128_i32 = arith.constant 128 : i32
      %14 = arith.maxsi %c0_i32_5, %13 : i32
      %15 = arith.minsi %c128_i32, %14 : i32
      %c0_i32_6 = arith.constant 0 : i32
      %c0_i32_7 = arith.constant 0 : i32
      %16 = arith.subi %15, %c0_i32_7 : i32
      %17 = arith.addi %c0_i32_7, %16 : i32
      %c1_i32 = arith.constant 1 : i32
      scf.for %arg11 = %c0_i32_7 to %17 step %c1_i32  : i32 {
        %c0_i32_24 = arith.constant 0 : i32
        %35 = arith.addi %c0_i32_24, %arg11 : i32
        %36 = arith.addi %4, %35 : i32
        %37 = arith.index_cast %36 : i32 to index
        %38 = memref.load %arg4[%37] : memref<768xi32, #tpu.memory_space<smem>>
        %c0_i32_25 = arith.constant 0 : i32
        %c0_i32_26 = arith.constant 0 : i32
        %39 = tpu.memref_slice %arg5[%38, %c0_i32_26] : memref<32x64xi32, #tpu.memory_space<any>> -> memref<1x64xi32, #tpu.memory_space<any>>
        %c0_i32_27 = arith.constant 0 : i32
        %40 = tpu.memref_slice %arg9[%35, %c0_i32_27] : memref<256x64xi32, #tpu.memory_space<vmem>> -> memref<1x64xi32, #tpu.memory_space<vmem>>
        %41 = tpu.memref_slice %arg10[%c0_i32_25] : memref<2x!tpu.dma_semaphore, #tpu.memory_space<semaphore_mem>> -> memref<1x!tpu.dma_semaphore, #tpu.memory_space<semaphore_mem>>
        %42 = tpu.memref_squeeze %41 : memref<1x!tpu.dma_semaphore, #tpu.memory_space<semaphore_mem>> -> memref<!tpu.dma_semaphore, #tpu.memory_space<semaphore_mem>>
        tpu.enqueue_dma source(%39 : memref<1x64xi32, #tpu.memory_space<any>>) target(%40 : memref<1x64xi32, #tpu.memory_space<vmem>>) target_semaphore(%42 : memref<!tpu.dma_semaphore, #tpu.memory_space<semaphore_mem>>)
      }
      %c128_i32_8 = arith.constant 128 : i32
      %18 = arith.subi %3, %c128_i32_8 : i32
      %c0_i32_9 = arith.constant 0 : i32
      %c128_i32_10 = arith.constant 128 : i32
      %19 = arith.maxsi %c0_i32_9, %18 : i32
      %20 = arith.minsi %c128_i32_10, %19 : i32
      %c0_i32_11 = arith.constant 0 : i32
      %c0_i32_12 = arith.constant 0 : i32
      %21 = arith.subi %20, %c0_i32_12 : i32
      %22 = arith.addi %c0_i32_12, %21 : i32
      %c1_i32_13 = arith.constant 1 : i32
      scf.for %arg11 = %c0_i32_12 to %22 step %c1_i32_13  : i32 {
        %c128_i32_24 = arith.constant 128 : i32
        %35 = arith.addi %c128_i32_24, %arg11 : i32
        %36 = arith.addi %4, %35 : i32
        %37 = arith.index_cast %36 : i32 to index
        %38 = memref.load %arg4[%37] : memref<768xi32, #tpu.memory_space<smem>>
        %c1_i32_25 = arith.constant 1 : i32
        %c0_i32_26 = arith.constant 0 : i32
        %39 = tpu.memref_slice %arg5[%38, %c0_i32_26] : memref<32x64xi32, #tpu.memory_space<any>> -> memref<1x64xi32, #tpu.memory_space<any>>
        %c0_i32_27 = arith.constant 0 : i32
        %40 = tpu.memref_slice %arg9[%35, %c0_i32_27] : memref<256x64xi32, #tpu.memory_space<vmem>> -> memref<1x64xi32, #tpu.memory_space<vmem>>
        %41 = tpu.memref_slice %arg10[%c1_i32_25] : memref<2x!tpu.dma_semaphore, #tpu.memory_space<semaphore_mem>> -> memref<1x!tpu.dma_semaphore, #tpu.memory_space<semaphore_mem>>
        %42 = tpu.memref_squeeze %41 : memref<1x!tpu.dma_semaphore, #tpu.memory_space<semaphore_mem>> -> memref<!tpu.dma_semaphore, #tpu.memory_space<semaphore_mem>>
        tpu.enqueue_dma source(%39 : memref<1x64xi32, #tpu.memory_space<any>>) target(%40 : memref<1x64xi32, #tpu.memory_space<vmem>>) target_semaphore(%42 : memref<!tpu.dma_semaphore, #tpu.memory_space<semaphore_mem>>)
      }
      %c0_i32_14 = arith.constant 0 : i32
      %23 = arith.subi %3, %c0_i32_14 : i32
      %c0_i32_15 = arith.constant 0 : i32
      %c128_i32_16 = arith.constant 128 : i32
      %24 = arith.maxsi %c0_i32_15, %23 : i32
      %25 = arith.minsi %c128_i32_16, %24 : i32
      %c0_i32_17 = arith.constant 0 : i32
      %26 = arith.cmpi sgt, %25, %c0_i32_17 : i32
      %27 = arith.extui %26 : i1 to i32
      %c0_i32_18 = arith.constant 0 : i32
      %28 = arith.cmpi ne, %27, %c0_i32_18 : i32
      scf.if %28 {
        %c0_i32_24 = arith.constant 0 : i32
        %35 = arith.subi %3, %c0_i32_24 : i32
        %c0_i32_25 = arith.constant 0 : i32
        %c128_i32_26 = arith.constant 128 : i32
        %36 = arith.maxsi %c0_i32_25, %35 : i32
        %37 = arith.minsi %c128_i32_26, %36 : i32
        %c0_i32_27 = arith.constant 0 : i32
        %c0_i32_28 = arith.constant 0 : i32
        %38 = arith.subi %37, %c0_i32_28 : i32
        %39 = arith.addi %c0_i32_28, %38 : i32
        %c1_i32_29 = arith.constant 1 : i32
        scf.for %arg11 = %c0_i32_28 to %39 step %c1_i32_29  : i32 {
          %c0_i32_43 = arith.constant 0 : i32
          %64 = arith.addi %c0_i32_43, %arg11 : i32
          %65 = arith.addi %4, %64 : i32
          %66 = arith.index_cast %65 : i32 to index
          %67 = memref.load %arg4[%66] : memref<768xi32, #tpu.memory_space<smem>>
          %c0_i32_44 = arith.constant 0 : i32
          %c0_i32_45 = arith.constant 0 : i32
          %68 = tpu.memref_slice %arg5[%67, %c0_i32_45] : memref<32x64xi32, #tpu.memory_space<any>> -> memref<1x64xi32, #tpu.memory_space<any>>
          %c0_i32_46 = arith.constant 0 : i32
          %69 = tpu.memref_slice %arg9[%64, %c0_i32_46] : memref<256x64xi32, #tpu.memory_space<vmem>> -> memref<1x64xi32, #tpu.memory_space<vmem>>
          %70 = tpu.memref_slice %arg10[%c0_i32_44] : memref<2x!tpu.dma_semaphore, #tpu.memory_space<semaphore_mem>> -> memref<1x!tpu.dma_semaphore, #tpu.memory_space<semaphore_mem>>
          %71 = tpu.memref_squeeze %70 : memref<1x!tpu.dma_semaphore, #tpu.memory_space<semaphore_mem>> -> memref<!tpu.dma_semaphore, #tpu.memory_space<semaphore_mem>>
          tpu.wait_dma2 semaphore(%71 : memref<!tpu.dma_semaphore, #tpu.memory_space<semaphore_mem>>) src(%68 : memref<1x64xi32, #tpu.memory_space<any>>) dst(%69 : memref<1x64xi32, #tpu.memory_space<vmem>>)
        }
        %c0 = arith.constant 0 : index
        %c0_30 = arith.constant 0 : index
        %40 = vector.load %arg9[%c0, %c0_30] : memref<256x64xi32, #tpu.memory_space<vmem>>, vector<128x64xi32>
        %c16_i32 = arith.constant 16 : i32
        %41 = vector.broadcast %c16_i32 : i32 to vector<128x64xi32>
        %42 = arith.shli %40, %41 : vector<128x64xi32>
        %43 = tpu.bitcast %42 : vector<128x64xi32> -> vector<128x64xf32>
        %44 = arith.truncf %43 : vector<128x64xf32> to vector<128x64xbf16>
        %c16_i32_31 = arith.constant 16 : i32
        %45 = vector.broadcast %c16_i32_31 : i32 to vector<128x64xi32>
        %46 = arith.shrui %40, %45 : vector<128x64xi32>
        %c16_i32_32 = arith.constant 16 : i32
        %47 = vector.broadcast %c16_i32_32 : i32 to vector<128x64xi32>
        %48 = arith.shli %46, %47 : vector<128x64xi32>
        %49 = tpu.bitcast %48 : vector<128x64xi32> -> vector<128x64xf32>
        %50 = arith.truncf %49 : vector<128x64xf32> to vector<128x64xbf16>
        %c0_33 = arith.constant 0 : index
        %c0_34 = arith.constant 0 : index
        %c0_35 = arith.constant 0 : index
        %51 = vector.load %arg6[%c0_33, %c0_34, %c0_35] : memref<1x128x128xbf16, #tpu.memory_space<vmem>>, vector<1x64x128xbf16>
        %52 = vector.shape_cast %51 : vector<1x64x128xbf16> to vector<64x128xbf16>
        %cst = arith.constant dense<0.000000e+00> : vector<128x128xf32>
        %53 = tpu.matmul %44, %52, %cst {dimension_numbers = #tpu.dot_dimension_numbers<[1], [0], [0], [1], [0, 0, 1, 1], [], []>} : vector<128x64xbf16>, vector<64x128xbf16>, vector<128x128xf32> -> vector<128x128xf32>
        %c0_36 = arith.constant 0 : index
        %c64 = arith.constant 64 : index
        %c0_37 = arith.constant 0 : index
        %54 = vector.load %arg6[%c0_36, %c64, %c0_37] : memref<1x128x128xbf16, #tpu.memory_space<vmem>>, vector<1x64x128xbf16>
        %55 = vector.shape_cast %54 : vector<1x64x128xbf16> to vector<64x128xbf16>
        %cst_38 = arith.constant dense<0.000000e+00> : vector<128x128xf32>
        %56 = tpu.matmul %50, %55, %cst_38 {dimension_numbers = #tpu.dot_dimension_numbers<[1], [0], [0], [1], [0, 0, 1, 1], [], []>} : vector<128x64xbf16>, vector<64x128xbf16>, vector<128x128xf32> -> vector<128x128xf32>
        %57 = arith.addf %53, %56 : vector<128x128xf32>
        %c0_i32_39 = arith.constant 0 : i32
        %58 = arith.cmpi eq, %1, %c0_i32_39 : i32
        %59 = arith.extui %58 : i1 to i32
        %c0_i32_40 = arith.constant 0 : i32
        %60 = arith.cmpi ne, %59, %c0_i32_40 : i32
        scf.if %60 {
          %c0_43 = arith.constant 0 : index
          %c0_44 = arith.constant 0 : index
          %64 = vector.load %arg7[%c0_43, %c0_44] : memref<1x128xf32, #tpu.memory_space<vmem>>, vector<1x128xf32>
          %65 = vector.broadcast %64 : vector<1x128xf32> to vector<128x128xf32>
          %66 = arith.addf %57, %65 : vector<128x128xf32>
          %67 = arith.truncf %66 : vector<128x128xf32> to vector<128x128xbf16>
          %c0_45 = arith.constant 0 : index
          %c0_46 = arith.constant 0 : index
          %68 = vector.load %arg8[%c0_45, %c0_46] : memref<256x128xbf16, #tpu.memory_space<vmem>>, vector<128x128xbf16>
          tpu.vector_store %arg8[%c0_45, %c0_46], %67 {strides = array<i32>} : memref<256x128xbf16, #tpu.memory_space<vmem>>, vector<128x128xbf16>,
        } else {
        }
        %c0_i32_41 = arith.constant 0 : i32
        %61 = arith.cmpi ne, %1, %c0_i32_41 : i32
        %62 = arith.extui %61 : i1 to i32
        %c0_i32_42 = arith.constant 0 : i32
        %63 = arith.cmpi ne, %62, %c0_i32_42 : i32
        scf.if %63 {
          %64 = arith.truncf %57 : vector<128x128xf32> to vector<128x128xbf16>
          %c0_43 = arith.constant 0 : index
          %c0_44 = arith.constant 0 : index
          %65 = vector.load %arg8[%c0_43, %c0_44] : memref<256x128xbf16, #tpu.memory_space<vmem>>, vector<128x128xbf16>
          tpu.vector_store %arg8[%c0_43, %c0_44], %64 {strides = array<i32>} : memref<256x128xbf16, #tpu.memory_space<vmem>>, vector<128x128xbf16>,
        } else {
        }
      } else {
      }
      %c128_i32_19 = arith.constant 128 : i32
      %29 = arith.subi %3, %c128_i32_19 : i32
      %c0_i32_20 = arith.constant 0 : i32
      %c128_i32_21 = arith.constant 128 : i32
      %30 = arith.maxsi %c0_i32_20, %29 : i32
      %31 = arith.minsi %c128_i32_21, %30 : i32
      %c0_i32_22 = arith.constant 0 : i32
      %32 = arith.cmpi sgt, %31, %c0_i32_22 : i32
      %33 = arith.extui %32 : i1 to i32
      %c0_i32_23 = arith.constant 0 : i32
      %34 = arith.cmpi ne, %33, %c0_i32_23 : i32
      scf.if %34 {
        %c128_i32_24 = arith.constant 128 : i32
        %35 = arith.subi %3, %c128_i32_24 : i32
        %c0_i32_25 = arith.constant 0 : i32
        %c128_i32_26 = arith.constant 128 : i32
        %36 = arith.maxsi %c0_i32_25, %35 : i32
        %37 = arith.minsi %c128_i32_26, %36 : i32
        %c0_i32_27 = arith.constant 0 : i32
        %c0_i32_28 = arith.constant 0 : i32
        %38 = arith.subi %37, %c0_i32_28 : i32
        %39 = arith.addi %c0_i32_28, %38 : i32
        %c1_i32_29 = arith.constant 1 : i32
        scf.for %arg11 = %c0_i32_28 to %39 step %c1_i32_29  : i32 {
          %c128_i32_42 = arith.constant 128 : i32
          %64 = arith.addi %c128_i32_42, %arg11 : i32
          %65 = arith.addi %4, %64 : i32
          %66 = arith.index_cast %65 : i32 to index
          %67 = memref.load %arg4[%66] : memref<768xi32, #tpu.memory_space<smem>>
          %c1_i32_43 = arith.constant 1 : i32
          %c0_i32_44 = arith.constant 0 : i32
          %68 = tpu.memref_slice %arg5[%67, %c0_i32_44] : memref<32x64xi32, #tpu.memory_space<any>> -> memref<1x64xi32, #tpu.memory_space<any>>
          %c0_i32_45 = arith.constant 0 : i32
          %69 = tpu.memref_slice %arg9[%64, %c0_i32_45] : memref<256x64xi32, #tpu.memory_space<vmem>> -> memref<1x64xi32, #tpu.memory_space<vmem>>
          %70 = tpu.memref_slice %arg10[%c1_i32_43] : memref<2x!tpu.dma_semaphore, #tpu.memory_space<semaphore_mem>> -> memref<1x!tpu.dma_semaphore, #tpu.memory_space<semaphore_mem>>
          %71 = tpu.memref_squeeze %70 : memref<1x!tpu.dma_semaphore, #tpu.memory_space<semaphore_mem>> -> memref<!tpu.dma_semaphore, #tpu.memory_space<semaphore_mem>>
          tpu.wait_dma2 semaphore(%71 : memref<!tpu.dma_semaphore, #tpu.memory_space<semaphore_mem>>) src(%68 : memref<1x64xi32, #tpu.memory_space<any>>) dst(%69 : memref<1x64xi32, #tpu.memory_space<vmem>>)
        }
        %c128 = arith.constant 128 : index
        %c0 = arith.constant 0 : index
        %40 = vector.load %arg9[%c128, %c0] : memref<256x64xi32, #tpu.memory_space<vmem>>, vector<128x64xi32>
        %c16_i32 = arith.constant 16 : i32
        %41 = vector.broadcast %c16_i32 : i32 to vector<128x64xi32>
        %42 = arith.shli %40, %41 : vector<128x64xi32>
        %43 = tpu.bitcast %42 : vector<128x64xi32> -> vector<128x64xf32>
        %44 = arith.truncf %43 : vector<128x64xf32> to vector<128x64xbf16>
        %c16_i32_30 = arith.constant 16 : i32
        %45 = vector.broadcast %c16_i32_30 : i32 to vector<128x64xi32>
        %46 = arith.shrui %40, %45 : vector<128x64xi32>
        %c16_i32_31 = arith.constant 16 : i32
        %47 = vector.broadcast %c16_i32_31 : i32 to vector<128x64xi32>
        %48 = arith.shli %46, %47 : vector<128x64xi32>
        %49 = tpu.bitcast %48 : vector<128x64xi32> -> vector<128x64xf32>
        %50 = arith.truncf %49 : vector<128x64xf32> to vector<128x64xbf16>
        %c0_32 = arith.constant 0 : index
        %c0_33 = arith.constant 0 : index
        %c0_34 = arith.constant 0 : index
        %51 = vector.load %arg6[%c0_32, %c0_33, %c0_34] : memref<1x128x128xbf16, #tpu.memory_space<vmem>>, vector<1x64x128xbf16>
        %52 = vector.shape_cast %51 : vector<1x64x128xbf16> to vector<64x128xbf16>
        %cst = arith.constant dense<0.000000e+00> : vector<128x128xf32>
        %53 = tpu.matmul %44, %52, %cst {dimension_numbers = #tpu.dot_dimension_numbers<[1], [0], [0], [1], [0, 0, 1, 1], [], []>} : vector<128x64xbf16>, vector<64x128xbf16>, vector<128x128xf32> -> vector<128x128xf32>
        %c0_35 = arith.constant 0 : index
        %c64 = arith.constant 64 : index
        %c0_36 = arith.constant 0 : index
        %54 = vector.load %arg6[%c0_35, %c64, %c0_36] : memref<1x128x128xbf16, #tpu.memory_space<vmem>>, vector<1x64x128xbf16>
        %55 = vector.shape_cast %54 : vector<1x64x128xbf16> to vector<64x128xbf16>
        %cst_37 = arith.constant dense<0.000000e+00> : vector<128x128xf32>
        %56 = tpu.matmul %50, %55, %cst_37 {dimension_numbers = #tpu.dot_dimension_numbers<[1], [0], [0], [1], [0, 0, 1, 1], [], []>} : vector<128x64xbf16>, vector<64x128xbf16>, vector<128x128xf32> -> vector<128x128xf32>
        %57 = arith.addf %53, %56 : vector<128x128xf32>
        %c0_i32_38 = arith.constant 0 : i32
        %58 = arith.cmpi eq, %1, %c0_i32_38 : i32
        %59 = arith.extui %58 : i1 to i32
        %c0_i32_39 = arith.constant 0 : i32
        %60 = arith.cmpi ne, %59, %c0_i32_39 : i32
        scf.if %60 {
          %c0_42 = arith.constant 0 : index
          %c0_43 = arith.constant 0 : index
          %64 = vector.load %arg7[%c0_42, %c0_43] : memref<1x128xf32, #tpu.memory_space<vmem>>, vector<1x128xf32>
          %65 = vector.broadcast %64 : vector<1x128xf32> to vector<128x128xf32>
          %66 = arith.addf %57, %65 : vector<128x128xf32>
          %67 = arith.truncf %66 : vector<128x128xf32> to vector<128x128xbf16>
          %c128_44 = arith.constant 128 : index
          %c0_45 = arith.constant 0 : index
          %68 = vector.load %arg8[%c128_44, %c0_45] : memref<256x128xbf16, #tpu.memory_space<vmem>>, vector<128x128xbf16>
          tpu.vector_store %arg8[%c128_44, %c0_45], %67 {strides = array<i32>} : memref<256x128xbf16, #tpu.memory_space<vmem>>, vector<128x128xbf16>,
        } else {
        }
        %c0_i32_40 = arith.constant 0 : i32
        %61 = arith.cmpi ne, %1, %c0_i32_40 : i32
        %62 = arith.extui %61 : i1 to i32
        %c0_i32_41 = arith.constant 0 : i32
        %63 = arith.cmpi ne, %62, %c0_i32_41 : i32
        scf.if %63 {
          %64 = arith.truncf %57 : vector<128x128xf32> to vector<128x128xbf16>
          %c128_42 = arith.constant 128 : index
          %c0_43 = arith.constant 0 : index
          %65 = vector.load %arg8[%c128_42, %c0_43] : memref<256x128xbf16, #tpu.memory_space<vmem>>, vector<128x128xbf16>
          tpu.vector_store %arg8[%c128_42, %c0_43], %64 {strides = array<i32>} : memref<256x128xbf16, #tpu.memory_space<vmem>>, vector<128x128xbf16>,
        } else {
        }
      } else {
      }
    } else {
    }
    %c0_i32_1 = arith.constant 0 : i32
    %8 = arith.cmpi sgt, %arg1, %c0_i32_1 : i32
    %c0_i32_2 = arith.constant 0 : i32
    %9 = arith.cmpi sgt, %3, %c0_i32_2 : i32
    %10 = arith.andi %8, %9 : i1
    %11 = arith.extui %10 : i1 to i32
    %c0_i32_3 = arith.constant 0 : i32
    %12 = arith.cmpi ne, %11, %c0_i32_3 : i32
    scf.if %12 {
      %c0 = arith.constant 0 : index
      %c0_4 = arith.constant 0 : index
      %13 = vector.load %arg9[%c0, %c0_4] : memref<256x64xi32, #tpu.memory_space<vmem>>, vector<256x64xi32>
      %c16_i32 = arith.constant 16 : i32
      %14 = vector.broadcast %c16_i32 : i32 to vector<256x64xi32>
      %15 = arith.shli %13, %14 : vector<256x64xi32>
      %16 = tpu.bitcast %15 : vector<256x64xi32> -> vector<256x64xf32>
      %17 = arith.truncf %16 : vector<256x64xf32> to vector<256x64xbf16>
      %c16_i32_5 = arith.constant 16 : i32
      %18 = vector.broadcast %c16_i32_5 : i32 to vector<256x64xi32>
      %19 = arith.shrui %13, %18 : vector<256x64xi32>
      %c16_i32_6 = arith.constant 16 : i32
      %20 = vector.broadcast %c16_i32_6 : i32 to vector<256x64xi32>
      %21 = arith.shli %19, %20 : vector<256x64xi32>
      %22 = tpu.bitcast %21 : vector<256x64xi32> -> vector<256x64xf32>
      %23 = arith.truncf %22 : vector<256x64xf32> to vector<256x64xbf16>
      %c0_7 = arith.constant 0 : index
      %c0_8 = arith.constant 0 : index
      %c0_9 = arith.constant 0 : index
      %24 = vector.load %arg6[%c0_7, %c0_8, %c0_9] : memref<1x128x128xbf16, #tpu.memory_space<vmem>>, vector<1x64x128xbf16>
      %25 = vector.shape_cast %24 : vector<1x64x128xbf16> to vector<64x128xbf16>
      %cst = arith.constant dense<0.000000e+00> : vector<256x128xf32>
      %26 = tpu.matmul %17, %25, %cst {dimension_numbers = #tpu.dot_dimension_numbers<[1], [0], [0], [1], [0, 0, 1, 1], [], []>} : vector<256x64xbf16>, vector<64x128xbf16>, vector<256x128xf32> -> vector<256x128xf32>
      %c0_10 = arith.constant 0 : index
      %c64 = arith.constant 64 : index
      %c0_11 = arith.constant 0 : index
      %27 = vector.load %arg6[%c0_10, %c64, %c0_11] : memref<1x128x128xbf16, #tpu.memory_space<vmem>>, vector<1x64x128xbf16>
      %28 = vector.shape_cast %27 : vector<1x64x128xbf16> to vector<64x128xbf16>
      %cst_12 = arith.constant dense<0.000000e+00> : vector<256x128xf32>
      %29 = tpu.matmul %23, %28, %cst_12 {dimension_numbers = #tpu.dot_dimension_numbers<[1], [0], [0], [1], [0, 0, 1, 1], [], []>} : vector<256x64xbf16>, vector<64x128xbf16>, vector<256x128xf32> -> vector<256x128xf32>
      %30 = arith.addf %26, %29 : vector<256x128xf32>
      %c0_i32_13 = arith.constant 0 : i32
      %31 = arith.cmpi eq, %1, %c0_i32_13 : i32
      %32 = arith.extui %31 : i1 to i32
      %c0_i32_14 = arith.constant 0 : i32
      %33 = arith.cmpi ne, %32, %c0_i32_14 : i32
      scf.if %33 {
        %c0_17 = arith.constant 0 : index
        %c0_18 = arith.constant 0 : index
        %37 = vector.load %arg7[%c0_17, %c0_18] : memref<1x128xf32, #tpu.memory_space<vmem>>, vector<1x128xf32>
        %38 = vector.broadcast %37 : vector<1x128xf32> to vector<256x128xf32>
        %39 = arith.addf %30, %38 : vector<256x128xf32>
        %40 = arith.truncf %39 : vector<256x128xf32> to vector<256x128xbf16>
        %c0_19 = arith.constant 0 : index
        %c0_20 = arith.constant 0 : index
        %41 = vector.load %arg8[%c0_19, %c0_20] : memref<256x128xbf16, #tpu.memory_space<vmem>>, vector<256x128xbf16>
        tpu.vector_store %arg8[%c0_19, %c0_20], %40 {strides = array<i32>} : memref<256x128xbf16, #tpu.memory_space<vmem>>, vector<256x128xbf16>,
      } else {
      }
      %c0_i32_15 = arith.constant 0 : i32
      %34 = arith.cmpi ne, %1, %c0_i32_15 : i32
      %35 = arith.extui %34 : i1 to i32
      %c0_i32_16 = arith.constant 0 : i32
      %36 = arith.cmpi ne, %35, %c0_i32_16 : i32
      scf.if %36 {
        %37 = arith.truncf %30 : vector<256x128xf32> to vector<256x128xbf16>
        %c0_17 = arith.constant 0 : index
        %c0_18 = arith.constant 0 : index
        %38 = vector.load %arg8[%c0_17, %c0_18] : memref<256x128xbf16, #tpu.memory_space<vmem>>, vector<256x128xbf16>
        tpu.vector_store %arg8[%c0_17, %c0_18], %37 {strides = array<i32>} : memref<256x128xbf16, #tpu.memory_space<vmem>>, vector<256x128xbf16>,
      } else {
      }
    } else {
    }
    return
  }
  func.func @transform_1(%arg0: i32, %arg1: i32, %arg2: memref<3xi32, #tpu.memory_space<smem>>, %arg3: memref<3xi32, #tpu.memory_space<smem>>, %arg4: memref<768xi32, #tpu.memory_space<smem>>) -> (i32, i32, i32) {
    %0 = arith.index_cast %arg0 : i32 to index
    %1 = memref.load %arg2[%0] : memref<3xi32, #tpu.memory_space<smem>>
    %c0_i32 = arith.constant 0 : i32
    %c0_i32_0 = arith.constant 0 : i32
    return %1, %c0_i32, %arg1 : i32, i32, i32
  }
  func.func @transform_2(%arg0: i32, %arg1: i32, %arg2: memref<3xi32, #tpu.memory_space<smem>>, %arg3: memref<3xi32, #tpu.memory_space<smem>>, %arg4: memref<768xi32, #tpu.memory_space<smem>>) -> (i32, i32) {
    %c0_i32 = arith.constant 0 : i32
    %c0_i32_0 = arith.constant 0 : i32
    return %c0_i32, %arg1 : i32, i32
  }
  func.func @transform_3(%arg0: i32, %arg1: i32, %arg2: memref<3xi32, #tpu.memory_space<smem>>, %arg3: memref<3xi32, #tpu.memory_space<smem>>, %arg4: memref<768xi32, #tpu.memory_space<smem>>) -> (i32, i32) {
    %c0_i32 = arith.constant 0 : i32
    return %arg0, %arg1 : i32, i32
  }
}

</mosaic_0001>

<llo_original>
// kernel: tpu_custom_call.1
$region0: #{tpu_custom_call.1}
  #allocation0 [shape = 'u32[]', space=smem, size = 0x4, offset = 0x4, fixed_abs, tag = 'smem constant byte address 0x4 - core index']
  #allocation1 [shape = 'u32[144,128]{1,0:T(1,128)}', space=vmem, size = 0x12000, scoped, tag = 'internal scratch']
  #allocation2 [shape = 's32[256,64]{1,0:T(8,128)}', space=vmem, size = 0x20000, scoped, tag = 'scratch operand']
  #allocation3 [shape = 's32[2]{0}', space=sflag, size = 0x8, scoped, tag = 'scratch operand']
  #allocation4 [shape = 's32[1]{0}', space=sflag, size = 0x4, scoped, tag = 'scoped memory for tpu_custom_call.1']
  #allocation5 [shape = 'u8[512]{0}', space=smem, size = 0x200, scoped, tag = 'prefetched SMEM operand 0']
  #allocation6 [shape = 'u8[512]{0}', space=smem, size = 0x200, scoped, tag = 'prefetched SMEM operand 1']
  #allocation7 [shape = 'u8[3072]{0}', space=smem, size = 0xc00, scoped, tag = 'prefetched SMEM operand 2']
  #allocation12 [shape = 's32[]', space=sflag, size = 0x4, offset = 0, fixed_abs, tag = 'sflag constant byte address 0x0 - dummy sync flag']
  #allocation13 [shape = 's32[]', space=sflag, size = 0x4, offset = 0, fixed_abs, tag = 'sflag constant byte address 0x0 - dummy sync flag']
  #allocation14 [shape = 'u32[]', space=smem, size = 0x4, offset = 0x44, fixed_abs, tag = 'smem constant byte address 0x44 - assertion arg 0']
  #allocation15 [shape = 'u32[]', space=smem, size = 0x4, offset = 0x48, fixed_abs, tag = 'smem constant byte address 0x48 - assertion arg 1']
  #allocation16 [shape = 's32[]', space=sflag, size = 0x4, offset = 0, fixed_abs, tag = 'sflag constant byte address 0x0 - dummy sync flag']
  #allocation17 [shape = 's32[]', space=sflag, size = 0x4, offset = 0, fixed_abs, tag = 'sflag constant byte address 0x0 - dummy sync flag']
  %s0 = inlined_call_operand.hbm [shape: s32[3], index: 0, kind: input, shape index: {}]
  %s1 = inlined_call_operand.vmem [shape: s32[3], index: 1, kind: input, shape index: {}]
  %s2 = inlined_call_operand.hbm [shape: s32[768], index: 2, kind: input, shape index: {}]
  %s3 = inlined_call_operand.hbm [shape: u32[32,64], index: 3, kind: input, shape index: {}]
  %s4 = inlined_call_operand.hbm [shape: bf16[3,128,128], index: 4, kind: input, shape index: {}]
  %s5 = inlined_call_operand.vmem [shape: f32[1,128], index: 5, kind: input, shape index: {}]
  %s6 = inlined_call_operand.hbm [shape: bf16[768,128], index: 6, kind: output, shape index: {}]
  %s7 = sld [smem:[#allocation0]]
  $region121: #{tpu_custom_call.1} parent=0
    _
  %s9 = ssub.s32 1, %s7
  %s10 = scalar_select 0, %s9, %s7
  %12 = dma.hbm_to_smem %s0, 16, [#allocation5], [#allocation4]
  %s13 = sshll.u32 %s1, 4
  %s14 = int_to_ptr.vmem [resolvable:$true] %s13
  %16 = dma.vmem_to_smem %s14, 16, [#allocation6], [#allocation4]
  %18 = dma.hbm_to_smem %s2, 96, [#allocation7], [#allocation4]
  %19 = dma.done [#allocation4], 128
  %20 = sfence
  $region1: #{tpu_custom_call.1} parent=0
    #allocation8 [shape = 'u8[65536]{0}', space=vmem, size = 0x10000, scoped, tag = 'input window, operand 4']
    #allocation9 [shape = 's32[2]{0}', space=sflag, size = 0x8, scoped, tag = 'scoped memory for tpu_custom_call.1']
    #allocation10 [shape = 's32[2]{0}', space=sflag, size = 0x8, scoped, tag = 'scoped memory for tpu_custom_call.1']
    #allocation11 [shape = 'u8[131072]{0}', space=vmem, size = 0x20000, scoped, tag = 'output window, operand 0']
    %21 = vsyncpa [#allocation9], 0
    %s22 = scalar_lea.sflag [#allocation9], 1
    %23 = vsyncpa %s22, 0
    %24 = vsyncpa [#allocation10], 0
    %s25 = scalar_lea.sflag [#allocation10], 1
    %26 = vsyncpa %s25, 0
    loop: start=0, step=1, limit=5
    $region2: #{tpu_custom_call.1} parent=1 // loop_pre_header
      _
    $region3: #{tpu_custom_call.1} parent=1 // loop_header
      %s28 = sphi 0, %s32
      %p29 = scmp.ge.s32.totalorder %s28, 5
      %s35 = sphi 0, %s47
      %s36 = sphi 0, %s43
      %s37 = sphi 0, %s35
      %s38 = sphi 0, %s36
      %s39 = sphi 0, %s37
      %s40 = sphi 0, %s38
      %s54 = sphi 0, %s56
      %s57 = sphi 0, %s54
      %s58 = sphi 0, %s57
      %s74 = sphi 0, %s58
      %s80 = sphi 0, %s82
      %s83 = sphi 0, %s80
      %s84 = sphi 0, %s83
      %s100 = sphi 0, %s84
      %s108 = sphi 0, %s110
      %s111 = sphi 0, %s108
      %s112 = sphi 0, %s111
      %s128 = sphi 0, %s112
    $region4: #{tpu_custom_call.1} parent=1 // loop_header_branch
      %31 = sbr.rel (%p29) target = $region8
    $region5: #{tpu_custom_call.1} parent=1 // loop_body
      %s33 = ssub.s32 %s28, 1
      %s34 = ssub.s32 %s28, 2
      %s41 = sadd.s32 1, %s36
      %p42 = scmp.ge.s32.totalorder %s41, 1
      %s43 = scalar_select %p42, 0, %s41
      %s44 = sadd.s32 1, %s35
      %s45 = scalar_select %p42, %s44, %s35
      %p46 = scmp.ge.s32.totalorder %s45, 3
      %s47 = scalar_select %p46, 0, %s45
      %s48 = sld [smem:[#allocation5 + %s35]]
      %s49 = sld [smem:[#allocation5 + %s47]]
      %s50 = ssub.s32 %s48, %s49
      %s51 = ssub.s32 %s36, %s43
      %s52 = sor.u32 %s50, %s51
      %p53 = scmp.eq.s32.totalorder %s52, 0
      %s55 = sadd.s32 %s54, 1
      %s56 = scalar_select %p53, %s54, %s55
      %p59 = pneg %p53
      %p60 = scmp.eq.s32.totalorder %s28, 2
      %p61 = por %p59, %p60
      %p62 = scmp.ne.s32.totalorder %s54, %s57
      %p63 = scmp.eq.s32.totalorder %s28, 0
      %p64 = por %p62, %p63
      %p65 = scmp.ne.s32.totalorder %s54, %s57
      %p66 = scmp.eq.s32.totalorder %s33, 2
      %p67 = por %p65, %p66
      %p68 = scmp.ne.s32.totalorder %s57, %s58
      %p69 = scmp.eq.s32.totalorder %s33, 0
      %p70 = por %p68, %p69
      %p71 = scmp.ne.s32.totalorder %s57, %s58
      %p72 = scmp.eq.s32.totalorder %s34, 2
      %p73 = por %p71, %p72
      %p75 = scmp.ne.s32.totalorder %s58, %s74
      %p76 = scmp.eq.s32.totalorder %s34, 0
      %p77 = por %p75, %p76
      %s78 = ssub.s32 %s36, %s43
      %p79 = scmp.eq.s32.totalorder %s78, 0
      %s81 = sadd.s32 %s80, 1
      %s82 = scalar_select %p79, %s80, %s81
      %p85 = pneg %p79
      %p86 = scmp.eq.s32.totalorder %s28, 2
      %p87 = por %p85, %p86
      %p88 = scmp.ne.s32.totalorder %s80, %s83
      %p89 = scmp.eq.s32.totalorder %s28, 0
      %p90 = por %p88, %p89
      %p91 = scmp.ne.s32.totalorder %s80, %s83
      %p92 = scmp.eq.s32.totalorder %s33, 2
      %p93 = por %p91, %p92
      %p94 = scmp.ne.s32.totalorder %s83, %s84
      %p95 = scmp.eq.s32.totalorder %s33, 0
      %p96 = por %p94, %p95
      %p97 = scmp.ne.s32.totalorder %s83, %s84
      %p98 = scmp.eq.s32.totalorder %s34, 2
      %p99 = por %p97, %p98
      %p101 = scmp.ne.s32.totalorder %s84, %s100
      %p102 = scmp.eq.s32.totalorder %s34, 0
      %p103 = por %p101, %p102
      %s104 = ssub.s32 %s35, %s47
      %s105 = ssub.s32 %s36, %s43
      %s106 = sor.u32 %s104, %s105
      %p107 = scmp.eq.s32.totalorder %s106, 0
      %s109 = sadd.s32 %s108, 1
      %s110 = scalar_select %p107, %s108, %s109
      %p113 = pneg %p107
      %p114 = scmp.eq.s32.totalorder %s28, 2
      %p115 = por %p113, %p114
      %p116 = scmp.ne.s32.totalorder %s108, %s111
      %p117 = scmp.eq.s32.totalorder %s28, 0
      %p118 = por %p116, %p117
      %p119 = scmp.ne.s32.totalorder %s108, %s111
      %p120 = scmp.eq.s32.totalorder %s33, 2
      %p121 = por %p119, %p120
      %p122 = scmp.ne.s32.totalorder %s111, %s112
      %p123 = scmp.eq.s32.totalorder %s33, 0
      %p124 = por %p122, %p123
      %p125 = scmp.ne.s32.totalorder %s111, %s112
      %p126 = scmp.eq.s32.totalorder %s34, 2
      %p127 = por %p125, %p126
      %p129 = scmp.ne.s32.totalorder %s112, %s128
      %p130 = scmp.eq.s32.totalorder %s34, 0
      %p131 = por %p129, %p130
      %p132 = scmp.le.s32.totalorder 1, %s28
      %p133 = scmp.lt.s32.totalorder %s28, 4
      %p134 = pnand %p132, %p133
      %p135 = pneg %p134
      // Predicated region
      $region9: #{tpu_custom_call.1} parent=5 // pred_check
        _
      $region10: #{tpu_custom_call.1} parent=5 // pred_check_branch
        %137 = sbr.rel (%p134) target = $region12
      $region11: #{tpu_custom_call.1} parent=5 // pred_region
        %s138 = ssub.s32 %s28, 1
        // Predicated region
        $region13: #{tpu_custom_call.1} parent=11 // pred_check
          %p139 = pneg %p96
        $region14: #{tpu_custom_call.1} parent=11 // pred_check_branch
          %141 = sbr.rel (%p139) target = $region16
        $region15: #{tpu_custom_call.1} parent=11 // pred_region
          %p142 = scmp.lt.s32.totalorder %s38, 0
          %s143 = scalar_select %p142, %s38, 0
          %s144 = scalar_lea.vmem %s5, %s143
        $region16: #{tpu_custom_call.1} parent=11 // pred_fallthru
          _
      $region12: #{tpu_custom_call.1} parent=5 // pred_fallthru
        _
      %p145 = scmp.lt.s32.totalorder %s28, 3
      // Predicated region
      $region17: #{tpu_custom_call.1} parent=5 // pred_check
        %p146 = pneg %p145
      $region18: #{tpu_custom_call.1} parent=5 // pred_check_branch
        %148 = sbr.rel (%p146) target = $region20
      $region19: #{tpu_custom_call.1} parent=5 // pred_region
        // Predicated region
        $region21: #{tpu_custom_call.1} parent=19 // pred_check
          %p149 = pneg %p64
        $region22: #{tpu_custom_call.1} parent=19 // pred_check_branch
          %151 = sbr.rel (%p149) target = $region24
        $region23: #{tpu_custom_call.1} parent=19 // pred_region
          %s152 = sand.u32 %s54, 1
          %s153 = scalar_lea.sflag [#allocation9], %s152
          %s154 = sand.u32 %s54, 1
          %s155 = smul.addr %s154, 64
          %s156 = scalar_lea.vmem [#allocation8], %s155
          %s157 = sld [smem:[#allocation5 + %s35]]
          %s159 = ssub.s32 1024, 1024
          %160 = vsyncadd %s153, %s159
          %s161 = smul.addr %s157, 16
          %s162 = sadd.s32 %s36, %s161
          %s163 = smul.addr %s162, 64
          %s164 = scalar_lea.hbm %s4, %s163
          %s165 = sshll.u32 %s156, 4
          %s166 = int_to_ptr.vmem [resolvable:$true] %s165
          %171 = dma.hbm_to_vmem [thread:$0]  %s164, 1024, %s166, %s153, 64, 64, 4
        $region24: #{tpu_custom_call.1} parent=19 // pred_fallthru
          _
      $region20: #{tpu_custom_call.1} parent=5 // pred_fallthru
        _
      %p172 = scmp.le.s32.totalorder 1, %s28
      %p173 = scmp.lt.s32.totalorder %s28, 4
      %p174 = pnand %p172, %p173
      %p175 = pneg %p174
      // Predicated region
      $region25: #{tpu_custom_call.1} parent=5 // pred_check
        _
      $region26: #{tpu_custom_call.1} parent=5 // pred_check_branch
        %177 = sbr.rel (%p174) target = $region28
      $region27: #{tpu_custom_call.1} parent=5 // pred_region
        %s178 = ssub.s32 %s28, 1
        %s179 = sand.u32 %s57, 1
        %s180 = scalar_lea.sflag [#allocation9], %s179
        %s181 = sand.u32 %s57, 1
        %s182 = smul.addr %s181, 64
        %s183 = scalar_lea.vmem [#allocation8], %s182
        // Predicated region
        $region29: #{tpu_custom_call.1} parent=27 // pred_check
          %p184 = pneg %p70
        $region30: #{tpu_custom_call.1} parent=27 // pred_check_branch
          %186 = sbr.rel (%p184) target = $region32
        $region31: #{tpu_custom_call.1} parent=27 // pred_region
          %187 = dma.done %s180, 1024
        $region32: #{tpu_custom_call.1} parent=27 // pred_fallthru
          _
        %s188 = sand.u32 %s57, 1
        %s189 = scalar_lea.sflag [#allocation9], %s188
        %s190 = sand.u32 %s57, 1
        %s191 = smul.addr %s190, 64
        %s192 = scalar_lea.vmem [#allocation8], %s191
        %p193 = pneg %p70
        %p194 = pneg %p67
        %p195 = scmp.lt.s32.totalorder %s38, 0
        %s196 = scalar_select %p195, %s38, 0
        %s197 = scalar_lea.vmem %s5, %s196
        %p198 = pneg %p96
        %p199 = pneg %p93
        %p200 = pneg %p124
        %p201 = pneg %p121
        %s202 = sand.u32 %s111, 1
        %s203 = scalar_lea.sflag [#allocation10], %s202
        %s204 = sand.u32 %s111, 1
        %s205 = smul.addr %s204, 128
        %s206 = scalar_lea.vmem [#allocation11], %s205
        %s207 = sld [smem:[#allocation5 + %s37]]
        %p208 = scmp.lt.s32.totalorder %s38, 0
        %s209 = scalar_select %p208, %s38, 0
        %s210 = scalar_lea.vmem %s5, %s209
        %s211 = smul.u32 32, %s37
        %s213 = sld [smem:[#allocation5 + %s37]]
        %s214 = sld [smem:[#allocation6 + %s37]]
        %s215 = smul.u32 %s37, 256
        %p216 = scmp.eq.s32.totalorder %s38, 0
        // Predicated region
        $region33: #{tpu_custom_call.1} parent=27 // pred_check
          %p217 = pneg %p216
        $region34: #{tpu_custom_call.1} parent=27 // pred_check_branch
          %219 = sbr.rel (%p217) target = $region36
        $region35: #{tpu_custom_call.1} parent=27 // pred_region
          %p220 = scmp.gt.s32.totalorder %s214, 0
          %s221 = scalar_select %p220, %s214, 0
          %p222 = scmp.lt.s32.totalorder %s221, 128
          %s223 = scalar_select %p222, %s221, 128
          // While loop
          $region37: #{tpu_custom_call.1} parent=35 // loop_pre_header
            _
          $region38: #{tpu_custom_call.1} parent=35 // loop_header
            %s225 = sphi 0, %s227
            %p226 = scmp.ge.s32.totalorder %s225, %s223
          $region39: #{tpu_custom_call.1} parent=35 // loop_header_branch
            %229 = sbr.rel (%p226) target = $region43
          $region40: #{tpu_custom_call.1} parent=35 // loop_body
            %s230 = sadd.s32 %s215, %s225
            %s231 = sld [smem:[#allocation7 + %s230]]
            %s232 = smul.addr %s231, 16
            %s233 = scalar_lea.hbm %s3, %s232
            %s234 = scalar_lea.vmem [#allocation2], %s225
            // Predicated region
            $region44: #{tpu_custom_call.1} parent=40 // pred_check
              _
            $region45: #{tpu_custom_call.1} parent=40 // pred_check_branch
              %236 = sbr.rel target = $region47
            $region46: #{tpu_custom_call.1} parent=40 // pred_region
              %237 = sst [smem:[#allocation14]] [#allocation13]
              %238 = sst [smem:[#allocation15]] [#allocation12]
            $region47: #{tpu_custom_call.1} parent=40 // pred_fallthru
              _
            %240 = shalt.err (0)
            %s242 = sshll.u32 %s234, 4
            %s243 = int_to_ptr.vmem [resolvable:$true] %s242
            %245 = dma.hbm_to_vmem [thread:$0]  %s233, 16, %s243, [#allocation3]
          $region41: #{tpu_custom_call.1} parent=35 // loop_footer
            %s227 = sadd.s32 %s225, 1
          $region42: #{tpu_custom_call.1} parent=35 // loop_footer_branch
            %224 = sbr.rel target = $region38
          $region43: #{tpu_custom_call.1} parent=35 // loop_exit
            _
          %s246 = ssub.s32 %s214, 128
          %p247 = scmp.gt.s32.totalorder %s246, 0
          %s248 = scalar_select %p247, %s246, 0
          %p249 = scmp.lt.s32.totalorder %s248, 128
          %s250 = scalar_select %p249, %s248, 128
          // While loop
          $region48: #{tpu_custom_call.1} parent=35 // loop_pre_header
            _
          $region49: #{tpu_custom_call.1} parent=35 // loop_header
            %s252 = sphi 0, %s254
            %p253 = scmp.ge.s32.totalorder %s252, %s250
          $region50: #{tpu_custom_call.1} parent=35 // loop_header_branch
            %256 = sbr.rel (%p253) target = $region54
          $region51: #{tpu_custom_call.1} parent=35 // loop_body
            %s257 = sadd.s32 %s252, 128
            %s258 = sadd.s32 %s215, %s257
            %s259 = sld [smem:[#allocation7 + %s258]]
            %s260 = smul.addr %s259, 16
            %s261 = scalar_lea.hbm %s3, %s260
            %s262 = scalar_lea.vmem [#allocation2], %s257
            %s263 = scalar_lea.sflag [#allocation3], 1
            // Predicated region
            $region55: #{tpu_custom_call.1} parent=51 // pred_check
              _
            $region56: #{tpu_custom_call.1} parent=51 // pred_check_branch
              %265 = sbr.rel target = $region58
            $region57: #{tpu_custom_call.1} parent=51 // pred_region
              %266 = sst [smem:[#allocation14]] [#allocation17]
              %267 = sst [smem:[#allocation15]] [#allocation16]
            $region58: #{tpu_custom_call.1} parent=51 // pred_fallthru
              _
            %269 = shalt.err (0)
            %s271 = sshll.u32 %s262, 4
            %s272 = int_to_ptr.vmem [resolvable:$true] %s271
            %274 = dma.hbm_to_vmem [thread:$0]  %s261, 16, %s272, %s263
          $region52: #{tpu_custom_call.1} parent=35 // loop_footer
            %s254 = sadd.s32 %s252, 1
          $region53: #{tpu_custom_call.1} parent=35 // loop_footer_branch
            %251 = sbr.rel target = $region49
          $region54: #{tpu_custom_call.1} parent=35 // loop_exit
            _
          %p275 = scmp.gt.s32.totalorder %s223, 0
          // Predicated region
          $region59: #{tpu_custom_call.1} parent=35 // pred_check
            %p276 = pneg %p275
          $region60: #{tpu_custom_call.1} parent=35 // pred_check_branch
            %278 = sbr.rel (%p276) target = $region62
          $region61: #{tpu_custom_call.1} parent=35 // pred_region
            // While loop
            $region63: #{tpu_custom_call.1} parent=61 // loop_pre_header
              _
            $region64: #{tpu_custom_call.1} parent=61 // loop_header
              %s280 = sphi 0, %s282
              %p281 = scmp.ge.s32.totalorder %s280, %s223
            $region65: #{tpu_custom_call.1} parent=61 // loop_header_branch
              %284 = sbr.rel (%p281) target = $region69
            $region66: #{tpu_custom_call.1} parent=61 // loop_body
              %s285 = sadd.s32 %s215, %s280
              %s286 = sld [smem:[#allocation7 + %s285]]
              %s287 = smul.u32 1, 1
              %s288 = sshll.u32 %s287, 4
              %289 = dma.done [#allocation3], %s288
            $region67: #{tpu_custom_call.1} parent=61 // loop_footer
              %s282 = sadd.s32 %s280, 1
            $region68: #{tpu_custom_call.1} parent=61 // loop_footer_branch
              %279 = sbr.rel target = $region64
            $region69: #{tpu_custom_call.1} parent=61 // loop_exit
              _
            %v290 = vld [vmem:[#allocation2] sm:$0xff]
            %v291 = vld [vmem:[#allocation2 + $0x8] sm:$0xff]
            %v292 = vld [vmem:[#allocation2 + $0x10] sm:$0xff]
            %v293 = vld [vmem:[#allocation2 + $0x18] sm:$0xff]
            %v294 = vld [vmem:[#allocation2 + $0x20] sm:$0xff]
            %v295 = vld [vmem:[#allocation2 + $0x28] sm:$0xff]
            %v296 = vld [vmem:[#allocation2 + $0x30] sm:$0xff]
            %v297 = vld [vmem:[#allocation2 + $0x38] sm:$0xff]
            %v298 = vld [vmem:[#allocation2 + $0x40] sm:$0xff]
            %v299 = vld [vmem:[#allocation2 + $0x48] sm:$0xff]
            %v300 = vld [vmem:[#allocation2 + $0x50] sm:$0xff]
            %v301 = vld [vmem:[#allocation2 + $0x58] sm:$0xff]
            %v302 = vld [vmem:[#allocation2 + $0x60] sm:$0xff]
            %v303 = vld [vmem:[#allocation2 + $0x68] sm:$0xff]
            %v304 = vld [vmem:[#allocation2 + $0x70] sm:$0xff]
            %v305 = vld [vmem:[#allocation2 + $0x78] sm:$0xff]
            %v306 = vshll.u32 %v290, 16
            %v307 = vshll.u32 %v291, 16
            %v308 = vshll.u32 %v292, 16
            %v309 = vshll.u32 %v293, 16
            %v310 = vshll.u32 %v294, 16
            %v311 = vshll.u32 %v295, 16
            %v312 = vshll.u32 %v296, 16
            %v313 = vshll.u32 %v297, 16
            %v314 = vshll.u32 %v298, 16
            %v315 = vshll.u32 %v299, 16
            %v316 = vshll.u32 %v300, 16
            %v317 = vshll.u32 %v301, 16
            %v318 = vshll.u32 %v302, 16
            %v319 = vshll.u32 %v303, 16
            %v320 = vshll.u32 %v304, 16
            %v321 = vshll.u32 %v305, 16
            %v338 = vpack.c.bf16 %v307, %v306
            %v339 = vpack.c.bf16 %v309, %v308
            %v340 = vpack.c.bf16 %v311, %v310
            %v341 = vpack.c.bf16 %v313, %v312
            %v342 = vpack.c.bf16 %v315, %v314
            %v343 = vpack.c.bf16 %v317, %v316
            %v344 = vpack.c.bf16 %v319, %v318
            %v345 = vpack.c.bf16 %v321, %v320
            %v346 = vshrl.u32 %v290, 16
            %v347 = vshrl.u32 %v291, 16
            %v348 = vshrl.u32 %v292, 16
            %v349 = vshrl.u32 %v293, 16
            %v350 = vshrl.u32 %v294, 16
            %v351 = vshrl.u32 %v295, 16
            %v352 = vshrl.u32 %v296, 16
            %v353 = vshrl.u32 %v297, 16
            %v354 = vshrl.u32 %v298, 16
            %v355 = vshrl.u32 %v299, 16
            %v356 = vshrl.u32 %v300, 16
            %v357 = vshrl.u32 %v301, 16
            %v358 = vshrl.u32 %v302, 16
            %v359 = vshrl.u32 %v303, 16
            %v360 = vshrl.u32 %v304, 16
            %v361 = vshrl.u32 %v305, 16
            %v362 = vshll.u32 %v346, 16
            %v363 = vshll.u32 %v347, 16
            %v364 = vshll.u32 %v348, 16
            %v365 = vshll.u32 %v349, 16
            %v366 = vshll.u32 %v350, 16
            %v367 = vshll.u32 %v351, 16
            %v368 = vshll.u32 %v352, 16
            %v369 = vshll.u32 %v353, 16
            %v370 = vshll.u32 %v354, 16
            %v371 = vshll.u32 %v355, 16
            %v372 = vshll.u32 %v356, 16
            %v373 = vshll.u32 %v357, 16
            %v374 = vshll.u32 %v358, 16
            %v375 = vshll.u32 %v359, 16
            %v376 = vshll.u32 %v360, 16
            %v377 = vshll.u32 %v361, 16
            %v394 = vpack.c.bf16 %v363, %v362
            %v395 = vpack.c.bf16 %v365, %v364
            %v396 = vpack.c.bf16 %v367, %v366
            %v397 = vpack.c.bf16 %v369, %v368
            %v398 = vpack.c.bf16 %v371, %v370
            %v399 = vpack.c.bf16 %v373, %v372
            %v400 = vpack.c.bf16 %v375, %v374
            %v401 = vpack.c.bf16 %v377, %v376
            %v402 = vld [vmem:[%s183] sm:$0xf]
            %v403 = vld [vmem:[%s183 + $0x4] sm:$0xf]
            %v404 = vld [vmem:[%s183 + $0x8] sm:$0xf]
            %v405 = vld [vmem:[%s183 + $0xc] sm:$0xf]
            %v406 = vld [vmem:[%s183 + $0x10] sm:$0xf]
            %v407 = vld [vmem:[%s183 + $0x14] sm:$0xf]
            %v408 = vld [vmem:[%s183 + $0x18] sm:$0xf]
            %v409 = vld [vmem:[%s183 + $0x1c] sm:$0xf]
            %v410 = vld [vmem:[%s183 + $0x20] sm:$0xf]
            %v411 = vld [vmem:[%s183 + $0x24] sm:$0xf]
            %v412 = vld [vmem:[%s183 + $0x28] sm:$0xf]
            %v413 = vld [vmem:[%s183 + $0x2c] sm:$0xf]
            %v414 = vld [vmem:[%s183 + $0x30] sm:$0xf]
            %v415 = vld [vmem:[%s183 + $0x34] sm:$0xf]
            %v416 = vld [vmem:[%s183 + $0x38] sm:$0xf]
            %v417 = vld [vmem:[%s183 + $0x3c] sm:$0xf]
            %v426 = vunpack.c.l.b16 %v410
            %v427 = vunpack.c.l.b16 %v411
            %v428 = vunpack.c.l.b16 %v412
            %v429 = vunpack.c.l.b16 %v413
            %v430 = vunpack.c.l.b16 %v414
            %v431 = vunpack.c.l.b16 %v415
            %v432 = vunpack.c.l.b16 %v416
            %v433 = vunpack.c.l.b16 %v417
            %v434 = vpack.c.b16 %v427, %v426
            %v435 = vpack.c.b16 %v429, %v428
            %v436 = vpack.c.b16 %v431, %v430
            %v437 = vpack.c.b16 %v433, %v432
            %vm442 = vcmask 523264
            %v444 = vsel %vm442, %v394, 0
            %v447 = vsel %vm442, %v395, 0
            %v450 = vsel %vm442, %v396, 0
            %v453 = vsel %vm442, %v397, 0
            %v456 = vsel %vm442, %v398, 0
            %v459 = vsel %vm442, %v399, 0
            %v462 = vsel %vm442, %v400, 0
            %v465 = vsel %vm442, %v401, 0
            %467 = vmatprep.subr.bf16.mxu0 0
            %468 = vmatpush1.bf16.msra.mxu0 %v434
            %469 = vmatprep.subr.bf16.mxu0 0
            %470 = vmatpush1.bf16.msra.mxu0 %v435
            %471 = vmatprep.subr.bf16.mxu0 0
            %472 = vmatpush1.bf16.msra.mxu0 %v436
            %473 = vmatprep.subr.bf16.mxu0 0
            %474 = vmatpush1.bf16.msra.mxu0 %v437
            %475 = vmatprep.subr.bf16.mxu0 0
            %476 = vmatpush1.bf16.msra.mxu0 0
            %477 = vmatprep.subr.bf16.mxu0 0
            %478 = vmatpush1.bf16.msra.mxu0 0
            %479 = vmatprep.subr.bf16.mxu0 0
            %480 = vmatpush1.bf16.msra.mxu0 0
            %481 = vmatprep.subr.bf16.mxu0 0
            %482 = vmatpush1.bf16.msra.mxu0 0
            %483 = vmatprep.subr.bf16.mxu0 0
            %484 = vmatpush1.bf16.msra.mxu0 0
            %485 = vmatprep.subr.bf16.mxu0 0
            %486 = vmatpush1.bf16.msra.mxu0 0
            %487 = vmatprep.subr.bf16.mxu0 0
            %488 = vmatpush1.bf16.msra.mxu0 0
            %489 = vmatprep.subr.bf16.mxu0 0
            %490 = vmatpush1.bf16.msra.mxu0 0
            %491 = vmatprep.subr.bf16.mxu0 0
            %492 = vmatpush1.bf16.msra.mxu0 0
            %493 = vmatprep.subr.bf16.mxu0 0
            %494 = vmatpush1.bf16.msra.mxu0 0
            %495 = vmatprep.subr.bf16.mxu0 0
            %496 = vmatpush1.bf16.msra.mxu0 0
            %497 = vmatprep.subr.bf16.mxu0 0
            %498 = vmatpush1.bf16.msra.mxu0 0
            %499 = vmatprep.mubr.bf16.mxu0 0
            %500 = vmatmul.mubr.bf16.gmra.mrb[0].mxu0 %v444
            %v501 = vpop.f32.mrb[0].mxu0
            %v502 = vadd.f32 0.0, %v501
            %v503 = vpop.f32.mrb[0].mxu0
            %v504 = vpop.f32.mrb[0].mxu0
            %v505 = vadd.f32 0.0, %v504
            %v506 = vpop.f32.mrb[0].mxu0
            %507 = vmatprep.mubr.bf16.mxu0 0
            %508 = vmatmul.mubr.bf16.gmra.mrb[0].mxu0 %v447
            %v509 = vpop.f32.mrb[0].mxu0
            %v510 = vadd.f32 0.0, %v509
            %v511 = vpop.f32.mrb[0].mxu0
            %v512 = vpop.f32.mrb[0].mxu0
            %v513 = vadd.f32 0.0, %v512
            %v514 = vpop.f32.mrb[0].mxu0
            %515 = vmatprep.mubr.bf16.mxu0 0
            %516 = vmatmul.mubr.bf16.gmra.mrb[0].mxu0 %v450
            %v517 = vpop.f32.mrb[0].mxu0
            %v518 = vadd.f32 0.0, %v517
            %v519 = vpop.f32.mrb[0].mxu0
            %v520 = vpop.f32.mrb[0].mxu0
            %v521 = vadd.f32 0.0, %v520
            %v522 = vpop.f32.mrb[0].mxu0
            %523 = vmatprep.mubr.bf16.mxu0 0
            %524 = vmatmul.mubr.bf16.gmra.mrb[0].mxu0 %v453
            %v525 = vpop.f32.mrb[0].mxu0
            %v526 = vadd.f32 0.0, %v525
            %v527 = vpop.f32.mrb[0].mxu0
            %v528 = vpop.f32.mrb[0].mxu0
            %v529 = vadd.f32 0.0, %v528
            %v530 = vpop.f32.mrb[0].mxu0
            %531 = vmatprep.mubr.bf16.mxu0 0
            %532 = vmatmul.mubr.bf16.gmra.mrb[0].mxu0 %v456
            %v533 = vpop.f32.mrb[0].mxu0
            %v534 = vadd.f32 0.0, %v533
            %v535 = vpop.f32.mrb[0].mxu0
            %v536 = vpop.f32.mrb[0].mxu0
            %v537 = vadd.f32 0.0, %v536
            %v538 = vpop.f32.mrb[0].mxu0
            %539 = vmatprep.mubr.bf16.mxu0 0
            %540 = vmatmul.mubr.bf16.gmra.mrb[0].mxu0 %v459
            %v541 = vpop.f32.mrb[0].mxu0
            %v542 = vadd.f32 0.0, %v541
            %v543 = vpop.f32.mrb[0].mxu0
            %v544 = vpop.f32.mrb[0].mxu0
            %v545 = vadd.f32 0.0, %v544
            %v546 = vpop.f32.mrb[0].mxu0
            %547 = vmatprep.mubr.bf16.mxu0 0
            %548 = vmatmul.mubr.bf16.gmra.mrb[0].mxu0 %v462
            %v549 = vpop.f32.mrb[0].mxu0
            %v550 = vadd.f32 0.0, %v549
            %v551 = vpop.f32.mrb[0].mxu0
            %v552 = vpop.f32.mrb[0].mxu0
            %v553 = vadd.f32 0.0, %v552
            %v554 = vpop.f32.mrb[0].mxu0
            %555 = vmatprep.mubr.bf16.mxu0 0
            %556 = vmatmul.mubr.bf16.gmra.mrb[0].mxu0 %v465
            %v557 = vpop.f32.mrb[0].mxu0
            %v558 = vadd.f32 0.0, %v557
            %v559 = vpop.f32.mrb[0].mxu0
            %v560 = vpop.f32.mrb[0].mxu0
            %v561 = vadd.f32 0.0, %v560
            %v562 = vpop.f32.mrb[0].mxu0
            %563 = vdwg.mxu0
            %v572 = vunpack.c.l.b16 %v402
            %v573 = vunpack.c.l.b16 %v403
            %v574 = vunpack.c.l.b16 %v404
            %v575 = vunpack.c.l.b16 %v405
            %v576 = vunpack.c.l.b16 %v406
            %v577 = vunpack.c.l.b16 %v407
            %v578 = vunpack.c.l.b16 %v408
            %v579 = vunpack.c.l.b16 %v409
            %v580 = vpack.c.b16 %v573, %v572
            %v581 = vpack.c.b16 %v575, %v574
            %v582 = vpack.c.b16 %v577, %v576
            %v583 = vpack.c.b16 %v579, %v578
            %v589 = vsel %vm442, %v338, 0
            %v592 = vsel %vm442, %v339, 0
            %v595 = vsel %vm442, %v340, 0
            %v598 = vsel %vm442, %v341, 0
            %v601 = vsel %vm442, %v342, 0
            %v604 = vsel %vm442, %v343, 0
            %v607 = vsel %vm442, %v344, 0
            %v610 = vsel %vm442, %v345, 0
            %612 = vmatprep.subr.bf16.mxu0 0
            %613 = vmatpush1.bf16.msra.mxu0 %v580
            %614 = vmatprep.subr.bf16.mxu0 0
            %615 = vmatpush1.bf16.msra.mxu0 %v581
            %616 = vmatprep.subr.bf16.mxu0 0
            %617 = vmatpush1.bf16.msra.mxu0 %v582
            %618 = vmatprep.subr.bf16.mxu0 0
            %619 = vmatpush1.bf16.msra.mxu0 %v583
            %620 = vmatprep.subr.bf16.mxu0 0
            %621 = vmatpush1.bf16.msra.mxu0 0
            %622 = vmatprep.subr.bf16.mxu0 0
            %623 = vmatpush1.bf16.msra.mxu0 0
            %624 = vmatprep.subr.bf16.mxu0 0
            %625 = vmatpush1.bf16.msra.mxu0 0
            %626 = vmatprep.subr.bf16.mxu0 0
            %627 = vmatpush1.bf16.msra.mxu0 0
            %628 = vmatprep.subr.bf16.mxu0 0
            %629 = vmatpush1.bf16.msra.mxu0 0
            %630 = vmatprep.subr.bf16.mxu0 0
            %631 = vmatpush1.bf16.msra.mxu0 0
            %632 = vmatprep.subr.bf16.mxu0 0
            %633 = vmatpush1.bf16.msra.mxu0 0
            %634 = vmatprep.subr.bf16.mxu0 0
            %635 = vmatpush1.bf16.msra.mxu0 0
            %636 = vmatprep.subr.bf16.mxu0 0
            %637 = vmatpush1.bf16.msra.mxu0 0
            %638 = vmatprep.subr.bf16.mxu0 0
            %639 = vmatpush1.bf16.msra.mxu0 0
            %640 = vmatprep.subr.bf16.mxu0 0
            %641 = vmatpush1.bf16.msra.mxu0 0
            %642 = vmatprep.subr.bf16.mxu0 0
            %643 = vmatpush1.bf16.msra.mxu0 0
            %644 = vmatprep.mubr.bf16.mxu0 0
            %645 = vmatmul.mubr.bf16.gmra.mrb[0].mxu0 %v589
            %v646 = vpop.f32.mrb[0].mxu0
            %v647 = vadd.f32 %v502, %v646
            %v648 = vpop.f32.mrb[0].mxu0
            %v649 = vpop.f32.mrb[0].mxu0
            %v650 = vadd.f32 %v505, %v649
            %v651 = vpop.f32.mrb[0].mxu0
            %652 = vmatprep.mubr.bf16.mxu0 0
            %653 = vmatmul.mubr.bf16.gmra.mrb[0].mxu0 %v592
            %v654 = vpop.f32.mrb[0].mxu0
            %v655 = vadd.f32 %v510, %v654
            %v656 = vpop.f32.mrb[0].mxu0
            %v657 = vpop.f32.mrb[0].mxu0
            %v658 = vadd.f32 %v513, %v657
            %v659 = vpop.f32.mrb[0].mxu0
            %660 = vmatprep.mubr.bf16.mxu0 0
            %661 = vmatmul.mubr.bf16.gmra.mrb[0].mxu0 %v595
            %v662 = vpop.f32.mrb[0].mxu0
            %v663 = vadd.f32 %v518, %v662
            %v664 = vpop.f32.mrb[0].mxu0
            %v665 = vpop.f32.mrb[0].mxu0
            %v666 = vadd.f32 %v521, %v665
            %v667 = vpop.f32.mrb[0].mxu0
            %668 = vmatprep.mubr.bf16.mxu0 0
            %669 = vmatmul.mubr.bf16.gmra.mrb[0].mxu0 %v598
            %v670 = vpop.f32.mrb[0].mxu0
            %v671 = vadd.f32 %v526, %v670
            %v672 = vpop.f32.mrb[0].mxu0
            %v673 = vpop.f32.mrb[0].mxu0
            %v674 = vadd.f32 %v529, %v673
            %v675 = vpop.f32.mrb[0].mxu0
            %676 = vmatprep.mubr.bf16.mxu0 0
            %677 = vmatmul.mubr.bf16.gmra.mrb[0].mxu0 %v601
            %v678 = vpop.f32.mrb[0].mxu0
            %v679 = vadd.f32 %v534, %v678
            %v680 = vpop.f32.mrb[0].mxu0
            %v681 = vpop.f32.mrb[0].mxu0
            %v682 = vadd.f32 %v537, %v681
            %v683 = vpop.f32.mrb[0].mxu0
            %684 = vmatprep.mubr.bf16.mxu0 0
            %685 = vmatmul.mubr.bf16.gmra.mrb[0].mxu0 %v604
            %v686 = vpop.f32.mrb[0].mxu0
            %v687 = vadd.f32 %v542, %v686
            %v688 = vpop.f32.mrb[0].mxu0
            %v689 = vpop.f32.mrb[0].mxu0
            %v690 = vadd.f32 %v545, %v689
            %v691 = vpop.f32.mrb[0].mxu0
            %692 = vmatprep.mubr.bf16.mxu0 0
            %693 = vmatmul.mubr.bf16.gmra.mrb[0].mxu0 %v607
            %v694 = vpop.f32.mrb[0].mxu0
            %v695 = vadd.f32 %v550, %v694
            %v696 = vpop.f32.mrb[0].mxu0
            %v697 = vpop.f32.mrb[0].mxu0
            %v698 = vadd.f32 %v553, %v697
            %v699 = vpop.f32.mrb[0].mxu0
            %700 = vmatprep.mubr.bf16.mxu0 0
            %701 = vmatmul.mubr.bf16.gmra.mrb[0].mxu0 %v610
            %v702 = vpop.f32.mrb[0].mxu0
            %v703 = vadd.f32 %v558, %v702
            %v704 = vpop.f32.mrb[0].mxu0
            %v705 = vpop.f32.mrb[0].mxu0
            %v706 = vadd.f32 %v561, %v705
            %v707 = vpop.f32.mrb[0].mxu0
            %708 = vdwg.mxu0
            %p709 = scmp.eq.s32.totalorder %s213, 0
            // Predicated region
            $region70: #{tpu_custom_call.1} parent=61 // pred_check
              %p710 = pneg %p709
            $region71: #{tpu_custom_call.1} parent=61 // pred_check_branch
              %712 = sbr.rel (%p710) target = $region73
            $region72: #{tpu_custom_call.1} parent=61 // pred_region
              %v713 = vld [vmem:[%s210] sm:$0x1]
              %v715 = vlaneseq
              %v716 = vshrl.u32 %v715, 7
              %v717 = vsub.s32 0, %v716
              %v718 = vrot.slane %v713, %v717
              %v720 = vadd.f32 %v647, %v718
              %v721 = vadd.f32 %v650, %v718
              %v722 = vadd.f32 %v655, %v718
              %v723 = vadd.f32 %v658, %v718
              %v724 = vadd.f32 %v663, %v718
              %v725 = vadd.f32 %v666, %v718
              %v726 = vadd.f32 %v671, %v718
              %v727 = vadd.f32 %v674, %v718
              %v728 = vadd.f32 %v679, %v718
              %v729 = vadd.f32 %v682, %v718
              %v730 = vadd.f32 %v687, %v718
              %v731 = vadd.f32 %v690, %v718
              %v732 = vadd.f32 %v695, %v718
              %v733 = vadd.f32 %v698, %v718
              %v734 = vadd.f32 %v703, %v718
              %v735 = vadd.f32 %v706, %v718
              %v736 = vpack.c.bf16 %v721, %v720
              %v737 = vpack.c.bf16 %v723, %v722
              %v738 = vpack.c.bf16 %v725, %v724
              %v739 = vpack.c.bf16 %v727, %v726
              %v740 = vpack.c.bf16 %v729, %v728
              %v741 = vpack.c.bf16 %v731, %v730
              %v742 = vpack.c.bf16 %v733, %v732
              %v743 = vpack.c.bf16 %v735, %v734
              %v752 = vunpack.c.l.b16 %v736
              %v753 = vunpack.c.h.b16 %v736
              %v754 = vunpack.c.l.b16 %v737
              %v755 = vunpack.c.h.b16 %v737
              %v756 = vunpack.c.l.b16 %v738
              %v757 = vunpack.c.h.b16 %v738
              %v758 = vunpack.c.l.b16 %v739
              %v759 = vunpack.c.h.b16 %v739
              %v760 = vunpack.c.l.b16 %v740
              %v761 = vunpack.c.h.b16 %v740
              %v762 = vunpack.c.l.b16 %v741
              %v763 = vunpack.c.h.b16 %v741
              %v764 = vunpack.c.l.b16 %v742
              %v765 = vunpack.c.h.b16 %v742
              %v766 = vunpack.c.l.b16 %v743
              %v767 = vunpack.c.h.b16 %v743
              %v768 = vpack.c.b16 %v752, %v752
              %v769 = vpack.c.b16 %v753, %v753
              %v770 = vpack.c.b16 %v754, %v754
              %v771 = vpack.c.b16 %v755, %v755
              %v772 = vpack.c.b16 %v756, %v756
              %v773 = vpack.c.b16 %v757, %v757
              %v774 = vpack.c.b16 %v758, %v758
              %v775 = vpack.c.b16 %v759, %v759
              %v776 = vpack.c.b16 %v760, %v760
              %v777 = vpack.c.b16 %v761, %v761
              %v778 = vpack.c.b16 %v762, %v762
              %v779 = vpack.c.b16 %v763, %v763
              %v780 = vpack.c.b16 %v764, %v764
              %v781 = vpack.c.b16 %v765, %v765
              %v782 = vpack.c.b16 %v766, %v766
              %v783 = vpack.c.b16 %v767, %v767
              %800 = vst [vmem:[%s206] sm:$0xf] %v768
              %801 = vst [vmem:[%s206 + $0x4] sm:$0xf] %v769
              %802 = vst [vmem:[%s206 + $0x8] sm:$0xf] %v770
              %803 = vst [vmem:[%s206 + $0xc] sm:$0xf] %v771
              %804 = vst [vmem:[%s206 + $0x10] sm:$0xf] %v772
              %805 = vst [vmem:[%s206 + $0x14] sm:$0xf] %v773
              %806 = vst [vmem:[%s206 + $0x18] sm:$0xf] %v774
              %807 = vst [vmem:[%s206 + $0x1c] sm:$0xf] %v775
              %808 = vst [vmem:[%s206 + $0x20] sm:$0xf] %v776
              %809 = vst [vmem:[%s206 + $0x24] sm:$0xf] %v777
              %810 = vst [vmem:[%s206 + $0x28] sm:$0xf] %v778
              %811 = vst [vmem:[%s206 + $0x2c] sm:$0xf] %v779
              %812 = vst [vmem:[%s206 + $0x30] sm:$0xf] %v780
              %813 = vst [vmem:[%s206 + $0x34] sm:$0xf] %v781
              %814 = vst [vmem:[%s206 + $0x38] sm:$0xf] %v782
              %815 = vst [vmem:[%s206 + $0x3c] sm:$0xf] %v783
            $region73: #{tpu_custom_call.1} parent=61 // pred_fallthru
              _
            %p816 = scmp.ne.s32.totalorder %s213, 0
            // Predicated region
            $region74: #{tpu_custom_call.1} parent=61 // pred_check
              %p817 = pneg %p816
            $region75: #{tpu_custom_call.1} parent=61 // pred_check_branch
              %819 = sbr.rel (%p817) target = $region77
            $region76: #{tpu_custom_call.1} parent=61 // pred_region
              %v820 = vpack.c.bf16 %v650, %v647
              %v821 = vpack.c.bf16 %v658, %v655
              %v822 = vpack.c.bf16 %v666, %v663
              %v823 = vpack.c.bf16 %v674, %v671
              %v824 = vpack.c.bf16 %v682, %v679
              %v825 = vpack.c.bf16 %v690, %v687
              %v826 = vpack.c.bf16 %v698, %v695
              %v827 = vpack.c.bf16 %v706, %v703
              %v836 = vunpack.c.l.b16 %v820
              %v837 = vunpack.c.h.b16 %v820
              %v838 = vunpack.c.l.b16 %v821
              %v839 = vunpack.c.h.b16 %v821
              %v840 = vunpack.c.l.b16 %v822
              %v841 = vunpack.c.h.b16 %v822
              %v842 = vunpack.c.l.b16 %v823
              %v843 = vunpack.c.h.b16 %v823
              %v844 = vunpack.c.l.b16 %v824
              %v845 = vunpack.c.h.b16 %v824
              %v846 = vunpack.c.l.b16 %v825
              %v847 = vunpack.c.h.b16 %v825
              %v848 = vunpack.c.l.b16 %v826
              %v849 = vunpack.c.h.b16 %v826
              %v850 = vunpack.c.l.b16 %v827
              %v851 = vunpack.c.h.b16 %v827
              %v852 = vpack.c.b16 %v836, %v836
              %v853 = vpack.c.b16 %v837, %v837
              %v854 = vpack.c.b16 %v838, %v838
              %v855 = vpack.c.b16 %v839, %v839
              %v856 = vpack.c.b16 %v840, %v840
              %v857 = vpack.c.b16 %v841, %v841
              %v858 = vpack.c.b16 %v842, %v842
              %v859 = vpack.c.b16 %v843, %v843
              %v860 = vpack.c.b16 %v844, %v844
              %v861 = vpack.c.b16 %v845, %v845
              %v862 = vpack.c.b16 %v846, %v846
              %v863 = vpack.c.b16 %v847, %v847
              %v864 = vpack.c.b16 %v848, %v848
              %v865 = vpack.c.b16 %v849, %v849
              %v866 = vpack.c.b16 %v850, %v850
              %v867 = vpack.c.b16 %v851, %v851
              %884 = vst [vmem:[%s206] sm:$0xf] %v852
              %885 = vst [vmem:[%s206 + $0x4] sm:$0xf] %v853
              %886 = vst [vmem:[%s206 + $0x8] sm:$0xf] %v854
              %887 = vst [vmem:[%s206 + $0xc] sm:$0xf] %v855
              %888 = vst [vmem:[%s206 + $0x10] sm:$0xf] %v856
              %889 = vst [vmem:[%s206 + $0x14] sm:$0xf] %v857
              %890 = vst [vmem:[%s206 + $0x18] sm:$0xf] %v858
              %891 = vst [vmem:[%s206 + $0x1c] sm:$0xf] %v859
              %892 = vst [vmem:[%s206 + $0x20] sm:$0xf] %v860
              %893 = vst [vmem:[%s206 + $0x24] sm:$0xf] %v861
              %894 = vst [vmem:[%s206 + $0x28] sm:$0xf] %v862
              %895 = vst [vmem:[%s206 + $0x2c] sm:$0xf] %v863
              %896 = vst [vmem:[%s206 + $0x30] sm:$0xf] %v864
              %897 = vst [vmem:[%s206 + $0x34] sm:$0xf] %v865
              %898 = vst [vmem:[%s206 + $0x38] sm:$0xf] %v866
              %899 = vst [vmem:[%s206 + $0x3c] sm:$0xf] %v867
            $region77: #{tpu_custom_call.1} parent=61 // pred_fallthru
              _
          $region62: #{tpu_custom_call.1} parent=35 // pred_fallthru
            _
          %p900 = scmp.gt.s32.totalorder %s250, 0
          // Predicated region
          $region78: #{tpu_custom_call.1} parent=35 // pred_check
            %p901 = pneg %p900
          $region79: #{tpu_custom_call.1} parent=35 // pred_check_branch
            %903 = sbr.rel (%p901) target = $region81
          $region80: #{tpu_custom_call.1} parent=35 // pred_region
            // While loop
            $region82: #{tpu_custom_call.1} parent=80 // loop_pre_header
              _
            $region83: #{tpu_custom_call.1} parent=80 // loop_header
              %s905 = sphi 0, %s907
              %p906 = scmp.ge.s32.totalorder %s905, %s250
            $region84: #{tpu_custom_call.1} parent=80 // loop_header_branch
              %909 = sbr.rel (%p906) target = $region88
            $region85: #{tpu_custom_call.1} parent=80 // loop_body
              %s910 = sadd.s32 %s905, 128
              %s911 = sadd.s32 %s215, %s910
              %s912 = sld [smem:[#allocation7 + %s911]]
              %s913 = scalar_lea.sflag [#allocation3], 1
              %s914 = smul.u32 1, 1
              %s915 = sshll.u32 %s914, 4
              %916 = dma.done %s913, %s915
            $region86: #{tpu_custom_call.1} parent=80 // loop_footer
              %s907 = sadd.s32 %s905, 1
            $region87: #{tpu_custom_call.1} parent=80 // loop_footer_branch
              %904 = sbr.rel target = $region83
            $region88: #{tpu_custom_call.1} parent=80 // loop_exit
              _
            %v917 = vld [vmem:[#allocation2 + $0x80] sm:$0xff]
            %v918 = vld [vmem:[#allocation2 + $0x88] sm:$0xff]
            %v919 = vld [vmem:[#allocation2 + $0x90] sm:$0xff]
            %v920 = vld [vmem:[#allocation2 + $0x98] sm:$0xff]
            %v921 = vld [vmem:[#allocation2 + $0xa0] sm:$0xff]
            %v922 = vld [vmem:[#allocation2 + $0xa8] sm:$0xff]
            %v923 = vld [vmem:[#allocation2 + $0xb0] sm:$0xff]
            %v924 = vld [vmem:[#allocation2 + $0xb8] sm:$0xff]
            %v925 = vld [vmem:[#allocation2 + $0xc0] sm:$0xff]
            %v926 = vld [vmem:[#allocation2 + $0xc8] sm:$0xff]
            %v927 = vld [vmem:[#allocation2 + $0xd0] sm:$0xff]
            %v928 = vld [vmem:[#allocation2 + $0xd8] sm:$0xff]
            %v929 = vld [vmem:[#allocation2 + $0xe0] sm:$0xff]
            %v930 = vld [vmem:[#allocation2 + $0xe8] sm:$0xff]
            %v931 = vld [vmem:[#allocation2 + $0xf0] sm:$0xff]
            %v932 = vld [vmem:[#allocation2 + $0xf8] sm:$0xff]
            %v933 = vshll.u32 %v917, 16
            %v934 = vshll.u32 %v918, 16
            %v935 = vshll.u32 %v919, 16
            %v936 = vshll.u32 %v920, 16
            %v937 = vshll.u32 %v921, 16
            %v938 = vshll.u32 %v922, 16
            %v939 = vshll.u32 %v923, 16
            %v940 = vshll.u32 %v924, 16
            %v941 = vshll.u32 %v925, 16
            %v942 = vshll.u32 %v926, 16
            %v943 = vshll.u32 %v927, 16
            %v944 = vshll.u32 %v928, 16
            %v945 = vshll.u32 %v929, 16
            %v946 = vshll.u32 %v930, 16
            %v947 = vshll.u32 %v931, 16
            %v948 = vshll.u32 %v932, 16
            %v965 = vpack.c.bf16 %v934, %v933
            %v966 = vpack.c.bf16 %v936, %v935
            %v967 = vpack.c.bf16 %v938, %v937
            %v968 = vpack.c.bf16 %v940, %v939
            %v969 = vpack.c.bf16 %v942, %v941
            %v970 = vpack.c.bf16 %v944, %v943
            %v971 = vpack.c.bf16 %v946, %v945
            %v972 = vpack.c.bf16 %v948, %v947
            %v973 = vshrl.u32 %v917, 16
            %v974 = vshrl.u32 %v918, 16
            %v975 = vshrl.u32 %v919, 16
            %v976 = vshrl.u32 %v920, 16
            %v977 = vshrl.u32 %v921, 16
            %v978 = vshrl.u32 %v922, 16
            %v979 = vshrl.u32 %v923, 16
            %v980 = vshrl.u32 %v924, 16
            %v981 = vshrl.u32 %v925, 16
            %v982 = vshrl.u32 %v926, 16
            %v983 = vshrl.u32 %v927, 16
            %v984 = vshrl.u32 %v928, 16
            %v985 = vshrl.u32 %v929, 16
            %v986 = vshrl.u32 %v930, 16
            %v987 = vshrl.u32 %v931, 16
            %v988 = vshrl.u32 %v932, 16
            %v989 = vshll.u32 %v973, 16
            %v990 = vshll.u32 %v974, 16
            %v991 = vshll.u32 %v975, 16
            %v992 = vshll.u32 %v976, 16
            %v993 = vshll.u32 %v977, 16
            %v994 = vshll.u32 %v978, 16
            %v995 = vshll.u32 %v979, 16
            %v996 = vshll.u32 %v980, 16
            %v997 = vshll.u32 %v981, 16
            %v998 = vshll.u32 %v982, 16
            %v999 = vshll.u32 %v983, 16
            %v1000 = vshll.u32 %v984, 16
            %v1001 = vshll.u32 %v985, 16
            %v1002 = vshll.u32 %v986, 16
            %v1003 = vshll.u32 %v987, 16
            %v1004 = vshll.u32 %v988, 16
            %v1021 = vpack.c.bf16 %v990, %v989
            %v1022 = vpack.c.bf16 %v992, %v991
            %v1023 = vpack.c.bf16 %v994, %v993
            %v1024 = vpack.c.bf16 %v996, %v995
            %v1025 = vpack.c.bf16 %v998, %v997
            %v1026 = vpack.c.bf16 %v1000, %v999
            %v1027 = vpack.c.bf16 %v1002, %v1001
            %v1028 = vpack.c.bf16 %v1004, %v1003
            %v1029 = vld [vmem:[%s183] sm:$0xf]
            %v1030 = vld [vmem:[%s183 + $0x4] sm:$0xf]
            %v1031 = vld [vmem:[%s183 + $0x8] sm:$0xf]
            %v1032 = vld [vmem:[%s183 + $0xc] sm:$0xf]
            %v1033 = vld [vmem:[%s183 + $0x10] sm:$0xf]
            %v1034 = vld [vmem:[%s183 + $0x14] sm:$0xf]
            %v1035 = vld [vmem:[%s183 + $0x18] sm:$0xf]
            %v1036 = vld [vmem:[%s183 + $0x1c] sm:$0xf]
            %v1037 = vld [vmem:[%s183 + $0x20] sm:$0xf]
            %v1038 = vld [vmem:[%s183 + $0x24] sm:$0xf]
            %v1039 = vld [vmem:[%s183 + $0x28] sm:$0xf]
            %v1040 = vld [vmem:[%s183 + $0x2c] sm:$0xf]
            %v1041 = vld [vmem:[%s183 + $0x30] sm:$0xf]
            %v1042 = vld [vmem:[%s183 + $0x34] sm:$0xf]
            %v1043 = vld [vmem:[%s183 + $0x38] sm:$0xf]
            %v1044 = vld [vmem:[%s183 + $0x3c] sm:$0xf]
            %v1053 = vunpack.c.l.b16 %v1037
            %v1054 = vunpack.c.l.b16 %v1038
            %v1055 = vunpack.c.l.b16 %v1039
            %v1056 = vunpack.c.l.b16 %v1040
            %v1057 = vunpack.c.l.b16 %v1041
            %v1058 = vunpack.c.l.b16 %v1042
            %v1059 = vunpack.c.l.b16 %v1043
            %v1060 = vunpack.c.l.b16 %v1044
            %v1061 = vpack.c.b16 %v1054, %v1053
            %v1062 = vpack.c.b16 %v1056, %v1055
            %v1063 = vpack.c.b16 %v1058, %v1057
            %v1064 = vpack.c.b16 %v1060, %v1059
            %vm1069 = vcmask 523264
            %v1071 = vsel %vm1069, %v1021, 0
            %v1074 = vsel %vm1069, %v1022, 0
            %v1077 = vsel %vm1069, %v1023, 0
            %v1080 = vsel %vm1069, %v1024, 0
            %v1083 = vsel %vm1069, %v1025, 0
            %v1086 = vsel %vm1069, %v1026, 0
            %v1089 = vsel %vm1069, %v1027, 0
            %v1092 = vsel %vm1069, %v1028, 0
            %1094 = vmatprep.subr.bf16.mxu0 0
            %1095 = vmatpush1.bf16.msra.mxu0 %v1061
            %1096 = vmatprep.subr.bf16.mxu0 0
            %1097 = vmatpush1.bf16.msra.mxu0 %v1062
            %1098 = vmatprep.subr.bf16.mxu0 0
            %1099 = vmatpush1.bf16.msra.mxu0 %v1063
            %1100 = vmatprep.subr.bf16.mxu0 0
            %1101 = vmatpush1.bf16.msra.mxu0 %v1064
            %1102 = vmatprep.subr.bf16.mxu0 0
            %1103 = vmatpush1.bf16.msra.mxu0 0
            %1104 = vmatprep.subr.bf16.mxu0 0
            %1105 = vmatpush1.bf16.msra.mxu0 0
            %1106 = vmatprep.subr.bf16.mxu0 0
            %1107 = vmatpush1.bf16.msra.mxu0 0
            %1108 = vmatprep.subr.bf16.mxu0 0
            %1109 = vmatpush1.bf16.msra.mxu0 0
            %1110 = vmatprep.subr.bf16.mxu0 0
            %1111 = vmatpush1.bf16.msra.mxu0 0
            %1112 = vmatprep.subr.bf16.mxu0 0
            %1113 = vmatpush1.bf16.msra.mxu0 0
            %1114 = vmatprep.subr.bf16.mxu0 0
            %1115 = vmatpush1.bf16.msra.mxu0 0
            %1116 = vmatprep.subr.bf16.mxu0 0
            %1117 = vmatpush1.bf16.msra.mxu0 0
            %1118 = vmatprep.subr.bf16.mxu0 0
            %1119 = vmatpush1.bf16.msra.mxu0 0
            %1120 = vmatprep.subr.bf16.mxu0 0
            %1121 = vmatpush1.bf16.msra.mxu0 0
            %1122 = vmatprep.subr.bf16.mxu0 0
            %1123 = vmatpush1.bf16.msra.mxu0 0
            %1124 = vmatprep.subr.bf16.mxu0 0
            %1125 = vmatpush1.bf16.msra.mxu0 0
            %1126 = vmatprep.mubr.bf16.mxu0 0
            %1127 = vmatmul.mubr.bf16.gmra.mrb[0].mxu0 %v1071
            %v1128 = vpop.f32.mrb[0].mxu0
            %v1129 = vadd.f32 0.0, %v1128
            %v1130 = vpop.f32.mrb[0].mxu0
            %v1131 = vpop.f32.mrb[0].mxu0
            %v1132 = vadd.f32 0.0, %v1131
            %v1133 = vpop.f32.mrb[0].mxu0
            %1134 = vmatprep.mubr.bf16.mxu0 0
            %1135 = vmatmul.mubr.bf16.gmra.mrb[0].mxu0 %v1074
            %v1136 = vpop.f32.mrb[0].mxu0
            %v1137 = vadd.f32 0.0, %v1136
            %v1138 = vpop.f32.mrb[0].mxu0
            %v1139 = vpop.f32.mrb[0].mxu0
            %v1140 = vadd.f32 0.0, %v1139
            %v1141 = vpop.f32.mrb[0].mxu0
            %1142 = vmatprep.mubr.bf16.mxu0 0
            %1143 = vmatmul.mubr.bf16.gmra.mrb[0].mxu0 %v1077
            %v1144 = vpop.f32.mrb[0].mxu0
            %v1145 = vadd.f32 0.0, %v1144
            %v1146 = vpop.f32.mrb[0].mxu0
            %v1147 = vpop.f32.mrb[0].mxu0
            %v1148 = vadd.f32 0.0, %v1147
            %v1149 = vpop.f32.mrb[0].mxu0
            %1150 = vmatprep.mubr.bf16.mxu0 0
            %1151 = vmatmul.mubr.bf16.gmra.mrb[0].mxu0 %v1080
            %v1152 = vpop.f32.mrb[0].mxu0
            %v1153 = vadd.f32 0.0, %v1152
            %v1154 = vpop.f32.mrb[0].mxu0
            %v1155 = vpop.f32.mrb[0].mxu0
            %v1156 = vadd.f32 0.0, %v1155
            %v1157 = vpop.f32.mrb[0].mxu0
            %1158 = vmatprep.mubr.bf16.mxu0 0
            %1159 = vmatmul.mubr.bf16.gmra.mrb[0].mxu0 %v1083
            %v1160 = vpop.f32.mrb[0].mxu0
            %v1161 = vadd.f32 0.0, %v1160
            %v1162 = vpop.f32.mrb[0].mxu0
            %v1163 = vpop.f32.mrb[0].mxu0
            %v1164 = vadd.f32 0.0, %v1163
            %v1165 = vpop.f32.mrb[0].mxu0
            %1166 = vmatprep.mubr.bf16.mxu0 0
            %1167 = vmatmul.mubr.bf16.gmra.mrb[0].mxu0 %v1086
            %v1168 = vpop.f32.mrb[0].mxu0
            %v1169 = vadd.f32 0.0, %v1168
            %v1170 = vpop.f32.mrb[0].mxu0
            %v1171 = vpop.f32.mrb[0].mxu0
            %v1172 = vadd.f32 0.0, %v1171
            %v1173 = vpop.f32.mrb[0].mxu0
            %1174 = vmatprep.mubr.bf16.mxu0 0
            %1175 = vmatmul.mubr.bf16.gmra.mrb[0].mxu0 %v1089
            %v1176 = vpop.f32.mrb[0].mxu0
            %v1177 = vadd.f32 0.0, %v1176
            %v1178 = vpop.f32.mrb[0].mxu0
            %v1179 = vpop.f32.mrb[0].mxu0
            %v1180 = vadd.f32 0.0, %v1179
            %v1181 = vpop.f32.mrb[0].mxu0
            %1182 = vmatprep.mubr.bf16.mxu0 0
            %1183 = vmatmul.mubr.bf16.gmra.mrb[0].mxu0 %v1092
            %v1184 = vpop.f32.mrb[0].mxu0
            %v1185 = vadd.f32 0.0, %v1184
            %v1186 = vpop.f32.mrb[0].mxu0
            %v1187 = vpop.f32.mrb[0].mxu0
            %v1188 = vadd.f32 0.0, %v1187
            %v1189 = vpop.f32.mrb[0].mxu0
            %1190 = vdwg.mxu0
            %v1199 = vunpack.c.l.b16 %v1029
            %v1200 = vunpack.c.l.b16 %v1030
            %v1201 = vunpack.c.l.b16 %v1031
            %v1202 = vunpack.c.l.b16 %v1032
            %v1203 = vunpack.c.l.b16 %v1033
            %v1204 = vunpack.c.l.b16 %v1034
            %v1205 = vunpack.c.l.b16 %v1035
            %v1206 = vunpack.c.l.b16 %v1036
            %v1207 = vpack.c.b16 %v1200, %v1199
            %v1208 = vpack.c.b16 %v1202, %v1201
            %v1209 = vpack.c.b16 %v1204, %v1203
            %v1210 = vpack.c.b16 %v1206, %v1205
            %v1216 = vsel %vm1069, %v965, 0
            %v1219 = vsel %vm1069, %v966, 0
            %v1222 = vsel %vm1069, %v967, 0
            %v1225 = vsel %vm1069, %v968, 0
            %v1228 = vsel %vm1069, %v969, 0
            %v1231 = vsel %vm1069, %v970, 0
            %v1234 = vsel %vm1069, %v971, 0
            %v1237 = vsel %vm1069, %v972, 0
            %1239 = vmatprep.subr.bf16.mxu0 0
            %1240 = vmatpush1.bf16.msra.mxu0 %v1207
            %1241 = vmatprep.subr.bf16.mxu0 0
            %1242 = vmatpush1.bf16.msra.mxu0 %v1208
            %1243 = vmatprep.subr.bf16.mxu0 0
            %1244 = vmatpush1.bf16.msra.mxu0 %v1209
            %1245 = vmatprep.subr.bf16.mxu0 0
            %1246 = vmatpush1.bf16.msra.mxu0 %v1210
            %1247 = vmatprep.subr.bf16.mxu0 0
            %1248 = vmatpush1.bf16.msra.mxu0 0
            %1249 = vmatprep.subr.bf16.mxu0 0
            %1250 = vmatpush1.bf16.msra.mxu0 0
            %1251 = vmatprep.subr.bf16.mxu0 0
            %1252 = vmatpush1.bf16.msra.mxu0 0
            %1253 = vmatprep.subr.bf16.mxu0 0
            %1254 = vmatpush1.bf16.msra.mxu0 0
            %1255 = vmatprep.subr.bf16.mxu0 0
            %1256 = vmatpush1.bf16.msra.mxu0 0
            %1257 = vmatprep.subr.bf16.mxu0 0
            %1258 = vmatpush1.bf16.msra.mxu0 0
            %1259 = vmatprep.subr.bf16.mxu0 0
            %1260 = vmatpush1.bf16.msra.mxu0 0
            %1261 = vmatprep.subr.bf16.mxu0 0
            %1262 = vmatpush1.bf16.msra.mxu0 0
            %1263 = vmatprep.subr.bf16.mxu0 0
            %1264 = vmatpush1.bf16.msra.mxu0 0
            %1265 = vmatprep.subr.bf16.mxu0 0
            %1266 = vmatpush1.bf16.msra.mxu0 0
            %1267 = vmatprep.subr.bf16.mxu0 0
            %1268 = vmatpush1.bf16.msra.mxu0 0
            %1269 = vmatprep.subr.bf16.mxu0 0
            %1270 = vmatpush1.bf16.msra.mxu0 0
            %1271 = vmatprep.mubr.bf16.mxu0 0
            %1272 = vmatmul.mubr.bf16.gmra.mrb[0].mxu0 %v1216
            %v1273 = vpop.f32.mrb[0].mxu0
            %v1274 = vadd.f32 %v1129, %v1273
            %v1275 = vpop.f32.mrb[0].mxu0
            %v1276 = vpop.f32.mrb[0].mxu0
            %v1277 = vadd.f32 %v1132, %v1276
            %v1278 = vpop.f32.mrb[0].mxu0
            %1279 = vmatprep.mubr.bf16.mxu0 0
            %1280 = vmatmul.mubr.bf16.gmra.mrb[0].mxu0 %v1219
            %v1281 = vpop.f32.mrb[0].mxu0
            %v1282 = vadd.f32 %v1137, %v1281
            %v1283 = vpop.f32.mrb[0].mxu0
            %v1284 = vpop.f32.mrb[0].mxu0
            %v1285 = vadd.f32 %v1140, %v1284
            %v1286 = vpop.f32.mrb[0].mxu0
            %1287 = vmatprep.mubr.bf16.mxu0 0
            %1288 = vmatmul.mubr.bf16.gmra.mrb[0].mxu0 %v1222
            %v1289 = vpop.f32.mrb[0].mxu0
            %v1290 = vadd.f32 %v1145, %v1289
            %v1291 = vpop.f32.mrb[0].mxu0
            %v1292 = vpop.f32.mrb[0].mxu0
            %v1293 = vadd.f32 %v1148, %v1292
            %v1294 = vpop.f32.mrb[0].mxu0
            %1295 = vmatprep.mubr.bf16.mxu0 0
            %1296 = vmatmul.mubr.bf16.gmra.mrb[0].mxu0 %v1225
            %v1297 = vpop.f32.mrb[0].mxu0
            %v1298 = vadd.f32 %v1153, %v1297
            %v1299 = vpop.f32.mrb[0].mxu0
            %v1300 = vpop.f32.mrb[0].mxu0
            %v1301 = vadd.f32 %v1156, %v1300
            %v1302 = vpop.f32.mrb[0].mxu0
            %1303 = vmatprep.mubr.bf16.mxu0 0
            %1304 = vmatmul.mubr.bf16.gmra.mrb[0].mxu0 %v1228
            %v1305 = vpop.f32.mrb[0].mxu0
            %v1306 = vadd.f32 %v1161, %v1305
            %v1307 = vpop.f32.mrb[0].mxu0
            %v1308 = vpop.f32.mrb[0].mxu0
            %v1309 = vadd.f32 %v1164, %v1308
            %v1310 = vpop.f32.mrb[0].mxu0
            %1311 = vmatprep.mubr.bf16.mxu0 0
            %1312 = vmatmul.mubr.bf16.gmra.mrb[0].mxu0 %v1231
            %v1313 = vpop.f32.mrb[0].mxu0
            %v1314 = vadd.f32 %v1169, %v1313
            %v1315 = vpop.f32.mrb[0].mxu0
            %v1316 = vpop.f32.mrb[0].mxu0
            %v1317 = vadd.f32 %v1172, %v1316
            %v1318 = vpop.f32.mrb[0].mxu0
            %1319 = vmatprep.mubr.bf16.mxu0 0
            %1320 = vmatmul.mubr.bf16.gmra.mrb[0].mxu0 %v1234
            %v1321 = vpop.f32.mrb[0].mxu0
            %v1322 = vadd.f32 %v1177, %v1321
            %v1323 = vpop.f32.mrb[0].mxu0
            %v1324 = vpop.f32.mrb[0].mxu0
            %v1325 = vadd.f32 %v1180, %v1324
            %v1326 = vpop.f32.mrb[0].mxu0
            %1327 = vmatprep.mubr.bf16.mxu0 0
            %1328 = vmatmul.mubr.bf16.gmra.mrb[0].mxu0 %v1237
            %v1329 = vpop.f32.mrb[0].mxu0
            %v1330 = vadd.f32 %v1185, %v1329
            %v1331 = vpop.f32.mrb[0].mxu0
            %v1332 = vpop.f32.mrb[0].mxu0
            %v1333 = vadd.f32 %v1188, %v1332
            %v1334 = vpop.f32.mrb[0].mxu0
            %1335 = vdwg.mxu0
            %p1336 = scmp.eq.s32.totalorder %s213, 0
            // Predicated region
            $region89: #{tpu_custom_call.1} parent=80 // pred_check
              %p1337 = pneg %p1336
            $region90: #{tpu_custom_call.1} parent=80 // pred_check_branch
              %1339 = sbr.rel (%p1337) target = $region92
            $region91: #{tpu_custom_call.1} parent=80 // pred_region
              %v1340 = vld [vmem:[%s210] sm:$0x1]
              %v1342 = vlaneseq
              %v1343 = vshrl.u32 %v1342, 7
              %v1344 = vsub.s32 0, %v1343
              %v1345 = vrot.slane %v1340, %v1344
              %v1347 = vadd.f32 %v1274, %v1345
              %v1348 = vadd.f32 %v1277, %v1345
              %v1349 = vadd.f32 %v1282, %v1345
              %v1350 = vadd.f32 %v1285, %v1345
              %v1351 = vadd.f32 %v1290, %v1345
              %v1352 = vadd.f32 %v1293, %v1345
              %v1353 = vadd.f32 %v1298, %v1345
              %v1354 = vadd.f32 %v1301, %v1345
              %v1355 = vadd.f32 %v1306, %v1345
              %v1356 = vadd.f32 %v1309, %v1345
              %v1357 = vadd.f32 %v1314, %v1345
              %v1358 = vadd.f32 %v1317, %v1345
              %v1359 = vadd.f32 %v1322, %v1345
              %v1360 = vadd.f32 %v1325, %v1345
              %v1361 = vadd.f32 %v1330, %v1345
              %v1362 = vadd.f32 %v1333, %v1345
              %v1363 = vpack.c.bf16 %v1348, %v1347
              %v1364 = vpack.c.bf16 %v1350, %v1349
              %v1365 = vpack.c.bf16 %v1352, %v1351
              %v1366 = vpack.c.bf16 %v1354, %v1353
              %v1367 = vpack.c.bf16 %v1356, %v1355
              %v1368 = vpack.c.bf16 %v1358, %v1357
              %v1369 = vpack.c.bf16 %v1360, %v1359
              %v1370 = vpack.c.bf16 %v1362, %v1361
              %v1379 = vunpack.c.l.b16 %v1363
              %v1380 = vunpack.c.h.b16 %v1363
              %v1381 = vunpack.c.l.b16 %v1364
              %v1382 = vunpack.c.h.b16 %v1364
              %v1383 = vunpack.c.l.b16 %v1365
              %v1384 = vunpack.c.h.b16 %v1365
              %v1385 = vunpack.c.l.b16 %v1366
              %v1386 = vunpack.c.h.b16 %v1366
              %v1387 = vunpack.c.l.b16 %v1367
              %v1388 = vunpack.c.h.b16 %v1367
              %v1389 = vunpack.c.l.b16 %v1368
              %v1390 = vunpack.c.h.b16 %v1368
              %v1391 = vunpack.c.l.b16 %v1369
              %v1392 = vunpack.c.h.b16 %v1369
              %v1393 = vunpack.c.l.b16 %v1370
              %v1394 = vunpack.c.h.b16 %v1370
              %v1395 = vpack.c.b16 %v1379, %v1379
              %v1396 = vpack.c.b16 %v1380, %v1380
              %v1397 = vpack.c.b16 %v1381, %v1381
              %v1398 = vpack.c.b16 %v1382, %v1382
              %v1399 = vpack.c.b16 %v1383, %v1383
              %v1400 = vpack.c.b16 %v1384, %v1384
              %v1401 = vpack.c.b16 %v1385, %v1385
              %v1402 = vpack.c.b16 %v1386, %v1386
              %v1403 = vpack.c.b16 %v1387, %v1387
              %v1404 = vpack.c.b16 %v1388, %v1388
              %v1405 = vpack.c.b16 %v1389, %v1389
              %v1406 = vpack.c.b16 %v1390, %v1390
              %v1407 = vpack.c.b16 %v1391, %v1391
              %v1408 = vpack.c.b16 %v1392, %v1392
              %v1409 = vpack.c.b16 %v1393, %v1393
              %v1410 = vpack.c.b16 %v1394, %v1394
              %1427 = vst [vmem:[%s206 + $0x40] sm:$0xf] %v1395
              %1428 = vst [vmem:[%s206 + $0x44] sm:$0xf] %v1396
              %1429 = vst [vmem:[%s206 + $0x48] sm:$0xf] %v1397
              %1430 = vst [vmem:[%s206 + $0x4c] sm:$0xf] %v1398
              %1431 = vst [vmem:[%s206 + $0x50] sm:$0xf] %v1399
              %1432 = vst [vmem:[%s206 + $0x54] sm:$0xf] %v1400
              %1433 = vst [vmem:[%s206 + $0x58] sm:$0xf] %v1401
              %1434 = vst [vmem:[%s206 + $0x5c] sm:$0xf] %v1402
              %1435 = vst [vmem:[%s206 + $0x60] sm:$0xf] %v1403
              %1436 = vst [vmem:[%s206 + $0x64] sm:$0xf] %v1404
              %1437 = vst [vmem:[%s206 + $0x68] sm:$0xf] %v1405
              %1438 = vst [vmem:[%s206 + $0x6c] sm:$0xf] %v1406
              %1439 = vst [vmem:[%s206 + $0x70] sm:$0xf] %v1407
              %1440 = vst [vmem:[%s206 + $0x74] sm:$0xf] %v1408
              %1441 = vst [vmem:[%s206 + $0x78] sm:$0xf] %v1409
              %1442 = vst [vmem:[%s206 + $0x7c] sm:$0xf] %v1410
            $region92: #{tpu_custom_call.1} parent=80 // pred_fallthru
              _
            %p1443 = scmp.ne.s32.totalorder %s213, 0
            // Predicated region
            $region93: #{tpu_custom_call.1} parent=80 // pred_check
              %p1444 = pneg %p1443
            $region94: #{tpu_custom_call.1} parent=80 // pred_check_branch
              %1446 = sbr.rel (%p1444) target = $region96
            $region95: #{tpu_custom_call.1} parent=80 // pred_region
              %v1447 = vpack.c.bf16 %v1277, %v1274
              %v1448 = vpack.c.bf16 %v1285, %v1282
              %v1449 = vpack.c.bf16 %v1293, %v1290
              %v1450 = vpack.c.bf16 %v1301, %v1298
              %v1451 = vpack.c.bf16 %v1309, %v1306
              %v1452 = vpack.c.bf16 %v1317, %v1314
              %v1453 = vpack.c.bf16 %v1325, %v1322
              %v1454 = vpack.c.bf16 %v1333, %v1330
              %v1463 = vunpack.c.l.b16 %v1447
              %v1464 = vunpack.c.h.b16 %v1447
              %v1465 = vunpack.c.l.b16 %v1448
              %v1466 = vunpack.c.h.b16 %v1448
              %v1467 = vunpack.c.l.b16 %v1449
              %v1468 = vunpack.c.h.b16 %v1449
              %v1469 = vunpack.c.l.b16 %v1450
              %v1470 = vunpack.c.h.b16 %v1450
              %v1471 = vunpack.c.l.b16 %v1451
              %v1472 = vunpack.c.h.b16 %v1451
              %v1473 = vunpack.c.l.b16 %v1452
              %v1474 = vunpack.c.h.b16 %v1452
              %v1475 = vunpack.c.l.b16 %v1453
              %v1476 = vunpack.c.h.b16 %v1453
              %v1477 = vunpack.c.l.b16 %v1454
              %v1478 = vunpack.c.h.b16 %v1454
              %v1479 = vpack.c.b16 %v1463, %v1463
              %v1480 = vpack.c.b16 %v1464, %v1464
              %v1481 = vpack.c.b16 %v1465, %v1465
              %v1482 = vpack.c.b16 %v1466, %v1466
              %v1483 = vpack.c.b16 %v1467, %v1467
              %v1484 = vpack.c.b16 %v1468, %v1468
              %v1485 = vpack.c.b16 %v1469, %v1469
              %v1486 = vpack.c.b16 %v1470, %v1470
              %v1487 = vpack.c.b16 %v1471, %v1471
              %v1488 = vpack.c.b16 %v1472, %v1472
              %v1489 = vpack.c.b16 %v1473, %v1473
              %v1490 = vpack.c.b16 %v1474, %v1474
              %v1491 = vpack.c.b16 %v1475, %v1475
              %v1492 = vpack.c.b16 %v1476, %v1476
              %v1493 = vpack.c.b16 %v1477, %v1477
              %v1494 = vpack.c.b16 %v1478, %v1478
              %1511 = vst [vmem:[%s206 + $0x40] sm:$0xf] %v1479
              %1512 = vst [vmem:[%s206 + $0x44] sm:$0xf] %v1480
              %1513 = vst [vmem:[%s206 + $0x48] sm:$0xf] %v1481
              %1514 = vst [vmem:[%s206 + $0x4c] sm:$0xf] %v1482
              %1515 = vst [vmem:[%s206 + $0x50] sm:$0xf] %v1483
              %1516 = vst [vmem:[%s206 + $0x54] sm:$0xf] %v1484
              %1517 = vst [vmem:[%s206 + $0x58] sm:$0xf] %v1485
              %1518 = vst [vmem:[%s206 + $0x5c] sm:$0xf] %v1486
              %1519 = vst [vmem:[%s206 + $0x60] sm:$0xf] %v1487
              %1520 = vst [vmem:[%s206 + $0x64] sm:$0xf] %v1488
              %1521 = vst [vmem:[%s206 + $0x68] sm:$0xf] %v1489
              %1522 = vst [vmem:[%s206 + $0x6c] sm:$0xf] %v1490
              %1523 = vst [vmem:[%s206 + $0x70] sm:$0xf] %v1491
              %1524 = vst [vmem:[%s206 + $0x74] sm:$0xf] %v1492
              %1525 = vst [vmem:[%s206 + $0x78] sm:$0xf] %v1493
              %1526 = vst [vmem:[%s206 + $0x7c] sm:$0xf] %v1494
            $region96: #{tpu_custom_call.1} parent=80 // pred_fallthru
              _
          $region81: #{tpu_custom_call.1} parent=35 // pred_fallthru
            _
        $region36: #{tpu_custom_call.1} parent=27 // pred_fallthru
          _
        %p1527 = scmp.gt.s32.totalorder %s38, 0
        %p1528 = scmp.gt.s32.totalorder %s214, 0
        %p1529 = pnand %p1527, %p1528
        %p1530 = pneg %p1529
        // Predicated region
        $region97: #{tpu_custom_call.1} parent=27 // pred_check
          _
        $region98: #{tpu_custom_call.1} parent=27 // pred_check_branch
          %1532 = sbr.rel (%p1529) target = $region100
        $region99: #{tpu_custom_call.1} parent=27 // pred_region
          %v1533 = vld [vmem:[#allocation2] sm:$0xff]
          %v1534 = vld [vmem:[#allocation2 + $0x8] sm:$0xff]
          %v1535 = vld [vmem:[#allocation2 + $0x10] sm:$0xff]
          %v1536 = vld [vmem:[#allocation2 + $0x18] sm:$0xff]
          %v1537 = vld [vmem:[#allocation2 + $0x20] sm:$0xff]
          %v1538 = vld [vmem:[#allocation2 + $0x28] sm:$0xff]
          %v1539 = vld [vmem:[#allocation2 + $0x30] sm:$0xff]
          %v1540 = vld [vmem:[#allocation2 + $0x38] sm:$0xff]
          %v1541 = vld [vmem:[#allocation2 + $0x40] sm:$0xff]
          %v1542 = vld [vmem:[#allocation2 + $0x48] sm:$0xff]
          %v1543 = vld [vmem:[#allocation2 + $0x50] sm:$0xff]
          %v1544 = vld [vmem:[#allocation2 + $0x58] sm:$0xff]
          %v1545 = vld [vmem:[#allocation2 + $0x60] sm:$0xff]
          %v1546 = vld [vmem:[#allocation2 + $0x68] sm:$0xff]
          %v1547 = vld [vmem:[#allocation2 + $0x70] sm:$0xff]
          %v1548 = vld [vmem:[#allocation2 + $0x78] sm:$0xff]
          %v1549 = vld [vmem:[#allocation2 + $0x80] sm:$0xff]
          %v1550 = vld [vmem:[#allocation2 + $0x88] sm:$0xff]
          %v1551 = vld [vmem:[#allocation2 + $0x90] sm:$0xff]
          %v1552 = vld [vmem:[#allocation2 + $0x98] sm:$0xff]
          %v1553 = vld [vmem:[#allocation2 + $0xa0] sm:$0xff]
          %v1554 = vld [vmem:[#allocation2 + $0xa8] sm:$0xff]
          %v1555 = vld [vmem:[#allocation2 + $0xb0] sm:$0xff]
          %v1556 = vld [vmem:[#allocation2 + $0xb8] sm:$0xff]
          %v1557 = vld [vmem:[#allocation2 + $0xc0] sm:$0xff]
          %v1558 = vld [vmem:[#allocation2 + $0xc8] sm:$0xff]
          %v1559 = vld [vmem:[#allocation2 + $0xd0] sm:$0xff]
          %v1560 = vld [vmem:[#allocation2 + $0xd8] sm:$0xff]
          %v1561 = vld [vmem:[#allocation2 + $0xe0] sm:$0xff]
          %v1562 = vld [vmem:[#allocation2 + $0xe8] sm:$0xff]
          %v1563 = vld [vmem:[#allocation2 + $0xf0] sm:$0xff]
          %v1564 = vld [vmem:[#allocation2 + $0xf8] sm:$0xff]
          %v1565 = vshll.u32 %v1533, 16
          %v1566 = vshll.u32 %v1534, 16
          %v1567 = vshll.u32 %v1535, 16
          %v1568 = vshll.u32 %v1536, 16
          %v1569 = vshll.u32 %v1537, 16
          %v1570 = vshll.u32 %v1538, 16
          %v1571 = vshll.u32 %v1539, 16
          %v1572 = vshll.u32 %v1540, 16
          %v1573 = vshll.u32 %v1541, 16
          %v1574 = vshll.u32 %v1542, 16
          %v1575 = vshll.u32 %v1543, 16
          %v1576 = vshll.u32 %v1544, 16
          %v1577 = vshll.u32 %v1545, 16
          %v1578 = vshll.u32 %v1546, 16
          %v1579 = vshll.u32 %v1547, 16
          %v1580 = vshll.u32 %v1548, 16
          %v1581 = vshll.u32 %v1549, 16
          %v1582 = vshll.u32 %v1550, 16
          %v1583 = vshll.u32 %v1551, 16
          %v1584 = vshll.u32 %v1552, 16
          %v1585 = vshll.u32 %v1553, 16
          %v1586 = vshll.u32 %v1554, 16
          %v1587 = vshll.u32 %v1555, 16
          %v1588 = vshll.u32 %v1556, 16
          %v1589 = vshll.u32 %v1557, 16
          %v1590 = vshll.u32 %v1558, 16
          %v1591 = vshll.u32 %v1559, 16
          %v1592 = vshll.u32 %v1560, 16
          %v1593 = vshll.u32 %v1561, 16
          %v1594 = vshll.u32 %v1562, 16
          %v1595 = vshll.u32 %v1563, 16
          %v1596 = vshll.u32 %v1564, 16
          %v1629 = vpack.c.bf16 %v1566, %v1565
          %v1630 = vpack.c.bf16 %v1568, %v1567
          %v1631 = vpack.c.bf16 %v1570, %v1569
          %v1632 = vpack.c.bf16 %v1572, %v1571
          %v1633 = vpack.c.bf16 %v1574, %v1573
          %v1634 = vpack.c.bf16 %v1576, %v1575
          %v1635 = vpack.c.bf16 %v1578, %v1577
          %v1636 = vpack.c.bf16 %v1580, %v1579
          %v1637 = vpack.c.bf16 %v1582, %v1581
          %v1638 = vpack.c.bf16 %v1584, %v1583
          %v1639 = vpack.c.bf16 %v1586, %v1585
          %v1640 = vpack.c.bf16 %v1588, %v1587
          %v1641 = vpack.c.bf16 %v1590, %v1589
          %v1642 = vpack.c.bf16 %v1592, %v1591
          %v1643 = vpack.c.bf16 %v1594, %v1593
          %v1644 = vpack.c.bf16 %v1596, %v1595
          %v1645 = vshrl.u32 %v1533, 16
          %v1646 = vshrl.u32 %v1534, 16
          %v1647 = vshrl.u32 %v1535, 16
          %v1648 = vshrl.u32 %v1536, 16
          %v1649 = vshrl.u32 %v1537, 16
          %v1650 = vshrl.u32 %v1538, 16
          %v1651 = vshrl.u32 %v1539, 16
          %v1652 = vshrl.u32 %v1540, 16
          %v1653 = vshrl.u32 %v1541, 16
          %v1654 = vshrl.u32 %v1542, 16
          %v1655 = vshrl.u32 %v1543, 16
          %v1656 = vshrl.u32 %v1544, 16
          %v1657 = vshrl.u32 %v1545, 16
          %v1658 = vshrl.u32 %v1546, 16
          %v1659 = vshrl.u32 %v1547, 16
          %v1660 = vshrl.u32 %v1548, 16
          %v1661 = vshrl.u32 %v1549, 16
          %v1662 = vshrl.u32 %v1550, 16
          %v1663 = vshrl.u32 %v1551, 16
          %v1664 = vshrl.u32 %v1552, 16
          %v1665 = vshrl.u32 %v1553, 16
          %v1666 = vshrl.u32 %v1554, 16
          %v1667 = vshrl.u32 %v1555, 16
          %v1668 = vshrl.u32 %v1556, 16
          %v1669 = vshrl.u32 %v1557, 16
          %v1670 = vshrl.u32 %v1558, 16
          %v1671 = vshrl.u32 %v1559, 16
          %v1672 = vshrl.u32 %v1560, 16
          %v1673 = vshrl.u32 %v1561, 16
          %v1674 = vshrl.u32 %v1562, 16
          %v1675 = vshrl.u32 %v1563, 16
          %v1676 = vshrl.u32 %v1564, 16
          %v1677 = vshll.u32 %v1645, 16
          %v1678 = vshll.u32 %v1646, 16
          %v1679 = vshll.u32 %v1647, 16
          %v1680 = vshll.u32 %v1648, 16
          %v1681 = vshll.u32 %v1649, 16
          %v1682 = vshll.u32 %v1650, 16
          %v1683 = vshll.u32 %v1651, 16
          %v1684 = vshll.u32 %v1652, 16
          %v1685 = vshll.u32 %v1653, 16
          %v1686 = vshll.u32 %v1654, 16
          %v1687 = vshll.u32 %v1655, 16
          %v1688 = vshll.u32 %v1656, 16
          %v1689 = vshll.u32 %v1657, 16
          %v1690 = vshll.u32 %v1658, 16
          %v1691 = vshll.u32 %v1659, 16
          %v1692 = vshll.u32 %v1660, 16
          %v1693 = vshll.u32 %v1661, 16
          %v1694 = vshll.u32 %v1662, 16
          %v1695 = vshll.u32 %v1663, 16
          %v1696 = vshll.u32 %v1664, 16
          %v1697 = vshll.u32 %v1665, 16
          %v1698 = vshll.u32 %v1666, 16
          %v1699 = vshll.u32 %v1667, 16
          %v1700 = vshll.u32 %v1668, 16
          %v1701 = vshll.u32 %v1669, 16
          %v1702 = vshll.u32 %v1670, 16
          %v1703 = vshll.u32 %v1671, 16
          %v1704 = vshll.u32 %v1672, 16
          %v1705 = vshll.u32 %v1673, 16
          %v1706 = vshll.u32 %v1674, 16
          %v1707 = vshll.u32 %v1675, 16
          %v1708 = vshll.u32 %v1676, 16
          %v1741 = vpack.c.bf16 %v1678, %v1677
          %v1742 = vpack.c.bf16 %v1680, %v1679
          %v1743 = vpack.c.bf16 %v1682, %v1681
          %v1744 = vpack.c.bf16 %v1684, %v1683
          %v1745 = vpack.c.bf16 %v1686, %v1685
          %v1746 = vpack.c.bf16 %v1688, %v1687
          %v1747 = vpack.c.bf16 %v1690, %v1689
          %v1748 = vpack.c.bf16 %v1692, %v1691
          %v1749 = vpack.c.bf16 %v1694, %v1693
          %v1750 = vpack.c.bf16 %v1696, %v1695
          %v1751 = vpack.c.bf16 %v1698, %v1697
          %v1752 = vpack.c.bf16 %v1700, %v1699
          %v1753 = vpack.c.bf16 %v1702, %v1701
          %v1754 = vpack.c.bf16 %v1704, %v1703
          %v1755 = vpack.c.bf16 %v1706, %v1705
          %v1756 = vpack.c.bf16 %v1708, %v1707
          %v1757 = vld [vmem:[%s183] sm:$0xf]
          %v1758 = vld [vmem:[%s183 + $0x4] sm:$0xf]
          %v1759 = vld [vmem:[%s183 + $0x8] sm:$0xf]
          %v1760 = vld [vmem:[%s183 + $0xc] sm:$0xf]
          %v1761 = vld [vmem:[%s183 + $0x10] sm:$0xf]
          %v1762 = vld [vmem:[%s183 + $0x14] sm:$0xf]
          %v1763 = vld [vmem:[%s183 + $0x18] sm:$0xf]
          %v1764 = vld [vmem:[%s183 + $0x1c] sm:$0xf]
          %v1765 = vld [vmem:[%s183 + $0x20] sm:$0xf]
          %v1766 = vld [vmem:[%s183 + $0x24] sm:$0xf]
          %v1767 = vld [vmem:[%s183 + $0x28] sm:$0xf]
          %v1768 = vld [vmem:[%s183 + $0x2c] sm:$0xf]
          %v1769 = vld [vmem:[%s183 + $0x30] sm:$0xf]
          %v1770 = vld [vmem:[%s183 + $0x34] sm:$0xf]
          %v1771 = vld [vmem:[%s183 + $0x38] sm:$0xf]
          %v1772 = vld [vmem:[%s183 + $0x3c] sm:$0xf]
          %v1781 = vunpack.c.l.b16 %v1765
          %v1782 = vunpack.c.l.b16 %v1766
          %v1783 = vunpack.c.l.b16 %v1767
          %v1784 = vunpack.c.l.b16 %v1768
          %v1785 = vunpack.c.l.b16 %v1769
          %v1786 = vunpack.c.l.b16 %v1770
          %v1787 = vunpack.c.l.b16 %v1771
          %v1788 = vunpack.c.l.b16 %v1772
          %v1789 = vpack.c.b16 %v1782, %v1781
          %v1790 = vpack.c.b16 %v1784, %v1783
          %v1791 = vpack.c.b16 %v1786, %v1785
          %v1792 = vpack.c.b16 %v1788, %v1787
          %vm1797 = vcmask 523264
          %v1799 = vsel %vm1797, %v1741, 0
          %v1802 = vsel %vm1797, %v1742, 0
          %v1805 = vsel %vm1797, %v1743, 0
          %v1808 = vsel %vm1797, %v1744, 0
          %v1811 = vsel %vm1797, %v1745, 0
          %v1814 = vsel %vm1797, %v1746, 0
          %v1817 = vsel %vm1797, %v1747, 0
          %v1820 = vsel %vm1797, %v1748, 0
          %v1823 = vsel %vm1797, %v1749, 0
          %v1826 = vsel %vm1797, %v1750, 0
          %v1829 = vsel %vm1797, %v1751, 0
          %v1832 = vsel %vm1797, %v1752, 0
          %v1835 = vsel %vm1797, %v1753, 0
          %v1838 = vsel %vm1797, %v1754, 0
          %v1841 = vsel %vm1797, %v1755, 0
          %v1844 = vsel %vm1797, %v1756, 0
          %1846 = vmatprep.subr.bf16.mxu0 0
          %1847 = vmatpush1.bf16.msra.mxu0 %v1789
          %1848 = vmatprep.subr.bf16.mxu0 0
          %1849 = vmatpush1.bf16.msra.mxu0 %v1790
          %1850 = vmatprep.subr.bf16.mxu0 0
          %1851 = vmatpush1.bf16.msra.mxu0 %v1791
          %1852 = vmatprep.subr.bf16.mxu0 0
          %1853 = vmatpush1.bf16.msra.mxu0 %v1792
          %1854 = vmatprep.subr.bf16.mxu0 0
          %1855 = vmatpush1.bf16.msra.mxu0 0
          %1856 = vmatprep.subr.bf16.mxu0 0
          %1857 = vmatpush1.bf16.msra.mxu0 0
          %1858 = vmatprep.subr.bf16.mxu0 0
          %1859 = vmatpush1.bf16.msra.mxu0 0
          %1860 = vmatprep.subr.bf16.mxu0 0
          %1861 = vmatpush1.bf16.msra.mxu0 0
          %1862 = vmatprep.subr.bf16.mxu0 0
          %1863 = vmatpush1.bf16.msra.mxu0 0
          %1864 = vmatprep.subr.bf16.mxu0 0
          %1865 = vmatpush1.bf16.msra.mxu0 0
          %1866 = vmatprep.subr.bf16.mxu0 0
          %1867 = vmatpush1.bf16.msra.mxu0 0
          %1868 = vmatprep.subr.bf16.mxu0 0
          %1869 = vmatpush1.bf16.msra.mxu0 0
          %1870 = vmatprep.subr.bf16.mxu0 0
          %1871 = vmatpush1.bf16.msra.mxu0 0
          %1872 = vmatprep.subr.bf16.mxu0 0
          %1873 = vmatpush1.bf16.msra.mxu0 0
          %1874 = vmatprep.subr.bf16.mxu0 0
          %1875 = vmatpush1.bf16.msra.mxu0 0
          %1876 = vmatprep.subr.bf16.mxu0 0
          %1877 = vmatpush1.bf16.msra.mxu0 0
          %1878 = vmatprep.mubr.bf16.mxu0 0
          %1879 = vmatmul.mubr.bf16.gmra.mrb[0].mxu0 %v1799
          %v1880 = vpop.f32.mrb[0].mxu0
          %v1881 = vadd.f32 0.0, %v1880
          %v1882 = vpop.f32.mrb[0].mxu0
          %v1883 = vpop.f32.mrb[0].mxu0
          %v1884 = vadd.f32 0.0, %v1883
          %v1885 = vpop.f32.mrb[0].mxu0
          %1886 = vmatprep.mubr.bf16.mxu0 0
          %1887 = vmatmul.mubr.bf16.gmra.mrb[0].mxu0 %v1802
          %v1888 = vpop.f32.mrb[0].mxu0
          %v1889 = vadd.f32 0.0, %v1888
          %v1890 = vpop.f32.mrb[0].mxu0
          %v1891 = vpop.f32.mrb[0].mxu0
          %v1892 = vadd.f32 0.0, %v1891
          %v1893 = vpop.f32.mrb[0].mxu0
          %1894 = vmatprep.mubr.bf16.mxu0 0
          %1895 = vmatmul.mubr.bf16.gmra.mrb[0].mxu0 %v1805
          %v1896 = vpop.f32.mrb[0].mxu0
          %v1897 = vadd.f32 0.0, %v1896
          %v1898 = vpop.f32.mrb[0].mxu0
          %v1899 = vpop.f32.mrb[0].mxu0
          %v1900 = vadd.f32 0.0, %v1899
          %v1901 = vpop.f32.mrb[0].mxu0
          %1902 = vmatprep.mubr.bf16.mxu0 0
          %1903 = vmatmul.mubr.bf16.gmra.mrb[0].mxu0 %v1808
          %v1904 = vpop.f32.mrb[0].mxu0
          %v1905 = vadd.f32 0.0, %v1904
          %v1906 = vpop.f32.mrb[0].mxu0
          %v1907 = vpop.f32.mrb[0].mxu0
          %v1908 = vadd.f32 0.0, %v1907
          %v1909 = vpop.f32.mrb[0].mxu0
          %1910 = vmatprep.mubr.bf16.mxu0 0
          %1911 = vmatmul.mubr.bf16.gmra.mrb[0].mxu0 %v1811
          %v1912 = vpop.f32.mrb[0].mxu0
          %v1913 = vadd.f32 0.0, %v1912
          %v1914 = vpop.f32.mrb[0].mxu0
          %v1915 = vpop.f32.mrb[0].mxu0
          %v1916 = vadd.f32 0.0, %v1915
          %v1917 = vpop.f32.mrb[0].mxu0
          %1918 = vmatprep.mubr.bf16.mxu0 0
          %1919 = vmatmul.mubr.bf16.gmra.mrb[0].mxu0 %v1814
          %v1920 = vpop.f32.mrb[0].mxu0
          %v1921 = vadd.f32 0.0, %v1920
          %v1922 = vpop.f32.mrb[0].mxu0
          %v1923 = vpop.f32.mrb[0].mxu0
          %v1924 = vadd.f32 0.0, %v1923
          %v1925 = vpop.f32.mrb[0].mxu0
          %1926 = vmatprep.mubr.bf16.mxu0 0
          %1927 = vmatmul.mubr.bf16.gmra.mrb[0].mxu0 %v1817
          %v1928 = vpop.f32.mrb[0].mxu0
          %v1929 = vadd.f32 0.0, %v1928
          %v1930 = vpop.f32.mrb[0].mxu0
          %v1931 = vpop.f32.mrb[0].mxu0
          %v1932 = vadd.f32 0.0, %v1931
          %v1933 = vpop.f32.mrb[0].mxu0
          %1934 = vmatprep.mubr.bf16.mxu0 0
          %1935 = vmatmul.mubr.bf16.gmra.mrb[0].mxu0 %v1820
          %v1936 = vpop.f32.mrb[0].mxu0
          %v1937 = vadd.f32 0.0, %v1936
          %v1938 = vpop.f32.mrb[0].mxu0
          %v1939 = vpop.f32.mrb[0].mxu0
          %v1940 = vadd.f32 0.0, %v1939
          %v1941 = vpop.f32.mrb[0].mxu0
          %1942 = vmatprep.mubr.bf16.mxu0 0
          %1943 = vmatmul.mubr.bf16.gmra.mrb[0].mxu0 %v1823
          %v1944 = vpop.f32.mrb[0].mxu0
          %v1945 = vadd.f32 0.0, %v1944
          %v1946 = vpop.f32.mrb[0].mxu0
          %v1947 = vpop.f32.mrb[0].mxu0
          %v1948 = vadd.f32 0.0, %v1947
          %v1949 = vpop.f32.mrb[0].mxu0
          %1950 = vmatprep.mubr.bf16.mxu0 0
          %1951 = vmatmul.mubr.bf16.gmra.mrb[0].mxu0 %v1826
          %v1952 = vpop.f32.mrb[0].mxu0
          %v1953 = vadd.f32 0.0, %v1952
          %v1954 = vpop.f32.mrb[0].mxu0
          %v1955 = vpop.f32.mrb[0].mxu0
          %v1956 = vadd.f32 0.0, %v1955
          %v1957 = vpop.f32.mrb[0].mxu0
          %1958 = vmatprep.mubr.bf16.mxu0 0
          %1959 = vmatmul.mubr.bf16.gmra.mrb[0].mxu0 %v1829
          %v1960 = vpop.f32.mrb[0].mxu0
          %v1961 = vadd.f32 0.0, %v1960
          %v1962 = vpop.f32.mrb[0].mxu0
          %v1963 = vpop.f32.mrb[0].mxu0
          %v1964 = vadd.f32 0.0, %v1963
          %v1965 = vpop.f32.mrb[0].mxu0
          %1966 = vmatprep.mubr.bf16.mxu0 0
          %1967 = vmatmul.mubr.bf16.gmra.mrb[0].mxu0 %v1832
          %v1968 = vpop.f32.mrb[0].mxu0
          %v1969 = vadd.f32 0.0, %v1968
          %v1970 = vpop.f32.mrb[0].mxu0
          %v1971 = vpop.f32.mrb[0].mxu0
          %v1972 = vadd.f32 0.0, %v1971
          %v1973 = vpop.f32.mrb[0].mxu0
          %1974 = vmatprep.mubr.bf16.mxu0 0
          %1975 = vmatmul.mubr.bf16.gmra.mrb[0].mxu0 %v1835
          %v1976 = vpop.f32.mrb[0].mxu0
          %v1977 = vadd.f32 0.0, %v1976
          %v1978 = vpop.f32.mrb[0].mxu0
          %v1979 = vpop.f32.mrb[0].mxu0
          %v1980 = vadd.f32 0.0, %v1979
          %v1981 = vpop.f32.mrb[0].mxu0
          %1982 = vmatprep.mubr.bf16.mxu0 0
          %1983 = vmatmul.mubr.bf16.gmra.mrb[0].mxu0 %v1838
          %v1984 = vpop.f32.mrb[0].mxu0
          %v1985 = vadd.f32 0.0, %v1984
          %v1986 = vpop.f32.mrb[0].mxu0
          %v1987 = vpop.f32.mrb[0].mxu0
          %v1988 = vadd.f32 0.0, %v1987
          %v1989 = vpop.f32.mrb[0].mxu0
          %1990 = vmatprep.mubr.bf16.mxu0 0
          %1991 = vmatmul.mubr.bf16.gmra.mrb[0].mxu0 %v1841
          %v1992 = vpop.f32.mrb[0].mxu0
          %v1993 = vadd.f32 0.0, %v1992
          %v1994 = vpop.f32.mrb[0].mxu0
          %v1995 = vpop.f32.mrb[0].mxu0
          %v1996 = vadd.f32 0.0, %v1995
          %v1997 = vpop.f32.mrb[0].mxu0
          %1998 = vmatprep.mubr.bf16.mxu0 0
          %1999 = vmatmul.mubr.bf16.gmra.mrb[0].mxu0 %v1844
          %v2000 = vpop.f32.mrb[0].mxu0
          %v2001 = vadd.f32 0.0, %v2000
          %v2002 = vpop.f32.mrb[0].mxu0
          %v2003 = vpop.f32.mrb[0].mxu0
          %v2004 = vadd.f32 0.0, %v2003
          %v2005 = vpop.f32.mrb[0].mxu0
          %2006 = vdwg.mxu0
          %v2015 = vunpack.c.l.b16 %v1757
          %v2016 = vunpack.c.l.b16 %v1758
          %v2017 = vunpack.c.l.b16 %v1759
          %v2018 = vunpack.c.l.b16 %v1760
          %v2019 = vunpack.c.l.b16 %v1761
          %v2020 = vunpack.c.l.b16 %v1762
          %v2021 = vunpack.c.l.b16 %v1763
          %v2022 = vunpack.c.l.b16 %v1764
          %v2023 = vpack.c.b16 %v2016, %v2015
          %v2024 = vpack.c.b16 %v2018, %v2017
          %v2025 = vpack.c.b16 %v2020, %v2019
          %v2026 = vpack.c.b16 %v2022, %v2021
          %v2032 = vsel %vm1797, %v1629, 0
          %v2035 = vsel %vm1797, %v1630, 0
          %v2038 = vsel %vm1797, %v1631, 0
          %v2041 = vsel %vm1797, %v1632, 0
          %v2044 = vsel %vm1797, %v1633, 0
          %v2047 = vsel %vm1797, %v1634, 0
          %v2050 = vsel %vm1797, %v1635, 0
          %v2053 = vsel %vm1797, %v1636, 0
          %v2056 = vsel %vm1797, %v1637, 0
          %v2059 = vsel %vm1797, %v1638, 0
          %v2062 = vsel %vm1797, %v1639, 0
          %v2065 = vsel %vm1797, %v1640, 0
          %v2068 = vsel %vm1797, %v1641, 0
          %v2071 = vsel %vm1797, %v1642, 0
          %v2074 = vsel %vm1797, %v1643, 0
          %v2077 = vsel %vm1797, %v1644, 0
          %2079 = vmatprep.subr.bf16.mxu0 0
          %2080 = vmatpush1.bf16.msra.mxu0 %v2023
          %2081 = vmatprep.subr.bf16.mxu0 0
          %2082 = vmatpush1.bf16.msra.mxu0 %v2024
          %2083 = vmatprep.subr.bf16.mxu0 0
          %2084 = vmatpush1.bf16.msra.mxu0 %v2025
          %2085 = vmatprep.subr.bf16.mxu0 0
          %2086 = vmatpush1.bf16.msra.mxu0 %v2026
          %2087 = vmatprep.subr.bf16.mxu0 0
          %2088 = vmatpush1.bf16.msra.mxu0 0
          %2089 = vmatprep.subr.bf16.mxu0 0
          %2090 = vmatpush1.bf16.msra.mxu0 0
          %2091 = vmatprep.subr.bf16.mxu0 0
          %2092 = vmatpush1.bf16.msra.mxu0 0
          %2093 = vmatprep.subr.bf16.mxu0 0
          %2094 = vmatpush1.bf16.msra.mxu0 0
          %2095 = vmatprep.subr.bf16.mxu0 0
          %2096 = vmatpush1.bf16.msra.mxu0 0
          %2097 = vmatprep.subr.bf16.mxu0 0
          %2098 = vmatpush1.bf16.msra.mxu0 0
          %2099 = vmatprep.subr.bf16.mxu0 0
          %2100 = vmatpush1.bf16.msra.mxu0 0
          %2101 = vmatprep.subr.bf16.mxu0 0
          %2102 = vmatpush1.bf16.msra.mxu0 0
          %2103 = vmatprep.subr.bf16.mxu0 0
          %2104 = vmatpush1.bf16.msra.mxu0 0
          %2105 = vmatprep.subr.bf16.mxu0 0
          %2106 = vmatpush1.bf16.msra.mxu0 0
          %2107 = vmatprep.subr.bf16.mxu0 0
          %2108 = vmatpush1.bf16.msra.mxu0 0
          %2109 = vmatprep.subr.bf16.mxu0 0
          %2110 = vmatpush1.bf16.msra.mxu0 0
          %2111 = vmatprep.mubr.bf16.mxu0 0
          %2112 = vmatmul.mubr.bf16.gmra.mrb[0].mxu0 %v2032
          %v2113 = vpop.f32.mrb[0].mxu0
          %v2114 = vadd.f32 %v1881, %v2113
          %v2115 = vpop.f32.mrb[0].mxu0
          %v2116 = vpop.f32.mrb[0].mxu0
          %v2117 = vadd.f32 %v1884, %v2116
          %v2118 = vpop.f32.mrb[0].mxu0
          %2119 = vmatprep.mubr.bf16.mxu0 0
          %2120 = vmatmul.mubr.bf16.gmra.mrb[0].mxu0 %v2035
          %v2121 = vpop.f32.mrb[0].mxu0
          %v2122 = vadd.f32 %v1889, %v2121
          %v2123 = vpop.f32.mrb[0].mxu0
          %v2124 = vpop.f32.mrb[0].mxu0
          %v2125 = vadd.f32 %v1892, %v2124
          %v2126 = vpop.f32.mrb[0].mxu0
          %2127 = vmatprep.mubr.bf16.mxu0 0
          %2128 = vmatmul.mubr.bf16.gmra.mrb[0].mxu0 %v2038
          %v2129 = vpop.f32.mrb[0].mxu0
          %v2130 = vadd.f32 %v1897, %v2129
          %v2131 = vpop.f32.mrb[0].mxu0
          %v2132 = vpop.f32.mrb[0].mxu0
          %v2133 = vadd.f32 %v1900, %v2132
          %v2134 = vpop.f32.mrb[0].mxu0
          %2135 = vmatprep.mubr.bf16.mxu0 0
          %2136 = vmatmul.mubr.bf16.gmra.mrb[0].mxu0 %v2041
          %v2137 = vpop.f32.mrb[0].mxu0
          %v2138 = vadd.f32 %v1905, %v2137
          %v2139 = vpop.f32.mrb[0].mxu0
          %v2140 = vpop.f32.mrb[0].mxu0
          %v2141 = vadd.f32 %v1908, %v2140
          %v2142 = vpop.f32.mrb[0].mxu0
          %2143 = vmatprep.mubr.bf16.mxu0 0
          %2144 = vmatmul.mubr.bf16.gmra.mrb[0].mxu0 %v2044
          %v2145 = vpop.f32.mrb[0].mxu0
          %v2146 = vadd.f32 %v1913, %v2145
          %v2147 = vpop.f32.mrb[0].mxu0
          %v2148 = vpop.f32.mrb[0].mxu0
          %v2149 = vadd.f32 %v1916, %v2148
          %v2150 = vpop.f32.mrb[0].mxu0
          %2151 = vmatprep.mubr.bf16.mxu0 0
          %2152 = vmatmul.mubr.bf16.gmra.mrb[0].mxu0 %v2047
          %v2153 = vpop.f32.mrb[0].mxu0
          %v2154 = vadd.f32 %v1921, %v2153
          %v2155 = vpop.f32.mrb[0].mxu0
          %v2156 = vpop.f32.mrb[0].mxu0
          %v2157 = vadd.f32 %v1924, %v2156
          %v2158 = vpop.f32.mrb[0].mxu0
          %2159 = vmatprep.mubr.bf16.mxu0 0
          %2160 = vmatmul.mubr.bf16.gmra.mrb[0].mxu0 %v2050
          %v2161 = vpop.f32.mrb[0].mxu0
          %v2162 = vadd.f32 %v1929, %v2161
          %v2163 = vpop.f32.mrb[0].mxu0
          %v2164 = vpop.f32.mrb[0].mxu0
          %v2165 = vadd.f32 %v1932, %v2164
          %v2166 = vpop.f32.mrb[0].mxu0
          %2167 = vmatprep.mubr.bf16.mxu0 0
          %2168 = vmatmul.mubr.bf16.gmra.mrb[0].mxu0 %v2053
          %v2169 = vpop.f32.mrb[0].mxu0
          %v2170 = vadd.f32 %v1937, %v2169
          %v2171 = vpop.f32.mrb[0].mxu0
          %v2172 = vpop.f32.mrb[0].mxu0
          %v2173 = vadd.f32 %v1940, %v2172
          %v2174 = vpop.f32.mrb[0].mxu0
          %2175 = vmatprep.mubr.bf16.mxu0 0
          %2176 = vmatmul.mubr.bf16.gmra.mrb[0].mxu0 %v2056
          %v2177 = vpop.f32.mrb[0].mxu0
          %v2178 = vadd.f32 %v1945, %v2177
          %v2179 = vpop.f32.mrb[0].mxu0
          %v2180 = vpop.f32.mrb[0].mxu0
          %v2181 = vadd.f32 %v1948, %v2180
          %v2182 = vpop.f32.mrb[0].mxu0
          %2183 = vmatprep.mubr.bf16.mxu0 0
          %2184 = vmatmul.mubr.bf16.gmra.mrb[0].mxu0 %v2059
          %v2185 = vpop.f32.mrb[0].mxu0
          %v2186 = vadd.f32 %v1953, %v2185
          %v2187 = vpop.f32.mrb[0].mxu0
          %v2188 = vpop.f32.mrb[0].mxu0
          %v2189 = vadd.f32 %v1956, %v2188
          %v2190 = vpop.f32.mrb[0].mxu0
          %2191 = vmatprep.mubr.bf16.mxu0 0
          %2192 = vmatmul.mubr.bf16.gmra.mrb[0].mxu0 %v2062
          %v2193 = vpop.f32.mrb[0].mxu0
          %v2194 = vadd.f32 %v1961, %v2193
          %v2195 = vpop.f32.mrb[0].mxu0
          %v2196 = vpop.f32.mrb[0].mxu0
          %v2197 = vadd.f32 %v1964, %v2196
          %v2198 = vpop.f32.mrb[0].mxu0
          %2199 = vmatprep.mubr.bf16.mxu0 0
          %2200 = vmatmul.mubr.bf16.gmra.mrb[0].mxu0 %v2065
          %v2201 = vpop.f32.mrb[0].mxu0
          %v2202 = vadd.f32 %v1969, %v2201
          %v2203 = vpop.f32.mrb[0].mxu0
          %v2204 = vpop.f32.mrb[0].mxu0
          %v2205 = vadd.f32 %v1972, %v2204
          %v2206 = vpop.f32.mrb[0].mxu0
          %2207 = vmatprep.mubr.bf16.mxu0 0
          %2208 = vmatmul.mubr.bf16.gmra.mrb[0].mxu0 %v2068
          %v2209 = vpop.f32.mrb[0].mxu0
          %v2210 = vadd.f32 %v1977, %v2209
          %v2211 = vpop.f32.mrb[0].mxu0
          %v2212 = vpop.f32.mrb[0].mxu0
          %v2213 = vadd.f32 %v1980, %v2212
          %v2214 = vpop.f32.mrb[0].mxu0
          %2215 = vmatprep.mubr.bf16.mxu0 0
          %2216 = vmatmul.mubr.bf16.gmra.mrb[0].mxu0 %v2071
          %v2217 = vpop.f32.mrb[0].mxu0
          %v2218 = vadd.f32 %v1985, %v2217
          %v2219 = vpop.f32.mrb[0].mxu0
          %v2220 = vpop.f32.mrb[0].mxu0
          %v2221 = vadd.f32 %v1988, %v2220
          %v2222 = vpop.f32.mrb[0].mxu0
          %2223 = vmatprep.mubr.bf16.mxu0 0
          %2224 = vmatmul.mubr.bf16.gmra.mrb[0].mxu0 %v2074
          %v2225 = vpop.f32.mrb[0].mxu0
          %v2226 = vadd.f32 %v1993, %v2225
          %v2227 = vpop.f32.mrb[0].mxu0
          %v2228 = vpop.f32.mrb[0].mxu0
          %v2229 = vadd.f32 %v1996, %v2228
          %v2230 = vpop.f32.mrb[0].mxu0
          %2231 = vmatprep.mubr.bf16.mxu0 0
          %2232 = vmatmul.mubr.bf16.gmra.mrb[0].mxu0 %v2077
          %v2233 = vpop.f32.mrb[0].mxu0
          %v2234 = vadd.f32 %v2001, %v2233
          %v2235 = vpop.f32.mrb[0].mxu0
          %v2236 = vpop.f32.mrb[0].mxu0
          %v2237 = vadd.f32 %v2004, %v2236
          %v2238 = vpop.f32.mrb[0].mxu0
          %2239 = vdwg.mxu0
          %p2240 = scmp.eq.s32.totalorder %s213, 0
          // Predicated region
          $region101: #{tpu_custom_call.1} parent=99 // pred_check
            %p2241 = pneg %p2240
          $region102: #{tpu_custom_call.1} parent=99 // pred_check_branch
            %2243 = sbr.rel (%p2241) target = $region104
          $region103: #{tpu_custom_call.1} parent=99 // pred_region
            %v2244 = vld [vmem:[%s210] sm:$0x1]
            %v2246 = vlaneseq
            %v2247 = vshrl.u32 %v2246, 7
            %v2248 = vsub.s32 0, %v2247
            %v2249 = vrot.slane %v2244, %v2248
            %v2251 = vadd.f32 %v2114, %v2249
            %v2252 = vadd.f32 %v2117, %v2249
            %v2253 = vadd.f32 %v2122, %v2249
            %v2254 = vadd.f32 %v2125, %v2249
            %v2255 = vadd.f32 %v2130, %v2249
            %v2256 = vadd.f32 %v2133, %v2249
            %v2257 = vadd.f32 %v2138, %v2249
            %v2258 = vadd.f32 %v2141, %v2249
            %v2259 = vadd.f32 %v2146, %v2249
            %v2260 = vadd.f32 %v2149, %v2249
            %v2261 = vadd.f32 %v2154, %v2249
            %v2262 = vadd.f32 %v2157, %v2249
            %v2263 = vadd.f32 %v2162, %v2249
            %v2264 = vadd.f32 %v2165, %v2249
            %v2265 = vadd.f32 %v2170, %v2249
            %v2266 = vadd.f32 %v2173, %v2249
            %v2267 = vadd.f32 %v2178, %v2249
            %v2268 = vadd.f32 %v2181, %v2249
            %v2269 = vadd.f32 %v2186, %v2249
            %v2270 = vadd.f32 %v2189, %v2249
            %v2271 = vadd.f32 %v2194, %v2249
            %v2272 = vadd.f32 %v2197, %v2249
            %v2273 = vadd.f32 %v2202, %v2249
            %v2274 = vadd.f32 %v2205, %v2249
            %v2275 = vadd.f32 %v2210, %v2249
            %v2276 = vadd.f32 %v2213, %v2249
            %v2277 = vadd.f32 %v2218, %v2249
            %v2278 = vadd.f32 %v2221, %v2249
            %v2279 = vadd.f32 %v2226, %v2249
            %v2280 = vadd.f32 %v2229, %v2249
            %v2281 = vadd.f32 %v2234, %v2249
            %v2282 = vadd.f32 %v2237, %v2249
            %v2283 = vpack.c.bf16 %v2252, %v2251
            %v2284 = vpack.c.bf16 %v2254, %v2253
            %v2285 = vpack.c.bf16 %v2256, %v2255
            %v2286 = vpack.c.bf16 %v2258, %v2257
            %v2287 = vpack.c.bf16 %v2260, %v2259
            %v2288 = vpack.c.bf16 %v2262, %v2261
            %v2289 = vpack.c.bf16 %v2264, %v2263
            %v2290 = vpack.c.bf16 %v2266, %v2265
            %v2291 = vpack.c.bf16 %v2268, %v2267
            %v2292 = vpack.c.bf16 %v2270, %v2269
            %v2293 = vpack.c.bf16 %v2272, %v2271
            %v2294 = vpack.c.bf16 %v2274, %v2273
            %v2295 = vpack.c.bf16 %v2276, %v2275
            %v2296 = vpack.c.bf16 %v2278, %v2277
            %v2297 = vpack.c.bf16 %v2280, %v2279
            %v2298 = vpack.c.bf16 %v2282, %v2281
            %v2315 = vunpack.c.l.b16 %v2283
            %v2316 = vunpack.c.h.b16 %v2283
            %v2317 = vunpack.c.l.b16 %v2284
            %v2318 = vunpack.c.h.b16 %v2284
            %v2319 = vunpack.c.l.b16 %v2285
            %v2320 = vunpack.c.h.b16 %v2285
            %v2321 = vunpack.c.l.b16 %v2286
            %v2322 = vunpack.c.h.b16 %v2286
            %v2323 = vunpack.c.l.b16 %v2287
            %v2324 = vunpack.c.h.b16 %v2287
            %v2325 = vunpack.c.l.b16 %v2288
            %v2326 = vunpack.c.h.b16 %v2288
            %v2327 = vunpack.c.l.b16 %v2289
            %v2328 = vunpack.c.h.b16 %v2289
            %v2329 = vunpack.c.l.b16 %v2290
            %v2330 = vunpack.c.h.b16 %v2290
            %v2331 = vunpack.c.l.b16 %v2291
            %v2332 = vunpack.c.h.b16 %v2291
            %v2333 = vunpack.c.l.b16 %v2292
            %v2334 = vunpack.c.h.b16 %v2292
            %v2335 = vunpack.c.l.b16 %v2293
            %v2336 = vunpack.c.h.b16 %v2293
            %v2337 = vunpack.c.l.b16 %v2294
            %v2338 = vunpack.c.h.b16 %v2294
            %v2339 = vunpack.c.l.b16 %v2295
            %v2340 = vunpack.c.h.b16 %v2295
            %v2341 = vunpack.c.l.b16 %v2296
            %v2342 = vunpack.c.h.b16 %v2296
            %v2343 = vunpack.c.l.b16 %v2297
            %v2344 = vunpack.c.h.b16 %v2297
            %v2345 = vunpack.c.l.b16 %v2298
            %v2346 = vunpack.c.h.b16 %v2298
            %v2347 = vpack.c.b16 %v2315, %v2315
            %v2348 = vpack.c.b16 %v2316, %v2316
            %v2349 = vpack.c.b16 %v2317, %v2317
            %v2350 = vpack.c.b16 %v2318, %v2318
            %v2351 = vpack.c.b16 %v2319, %v2319
            %v2352 = vpack.c.b16 %v2320, %v2320
            %v2353 = vpack.c.b16 %v2321, %v2321
            %v2354 = vpack.c.b16 %v2322, %v2322
            %v2355 = vpack.c.b16 %v2323, %v2323
            %v2356 = vpack.c.b16 %v2324, %v2324
            %v2357 = vpack.c.b16 %v2325, %v2325
            %v2358 = vpack.c.b16 %v2326, %v2326
            %v2359 = vpack.c.b16 %v2327, %v2327
            %v2360 = vpack.c.b16 %v2328, %v2328
            %v2361 = vpack.c.b16 %v2329, %v2329
            %v2362 = vpack.c.b16 %v2330, %v2330
            %v2363 = vpack.c.b16 %v2331, %v2331
            %v2364 = vpack.c.b16 %v2332, %v2332
            %v2365 = vpack.c.b16 %v2333, %v2333
            %v2366 = vpack.c.b16 %v2334, %v2334
            %v2367 = vpack.c.b16 %v2335, %v2335
            %v2368 = vpack.c.b16 %v2336, %v2336
            %v2369 = vpack.c.b16 %v2337, %v2337
            %v2370 = vpack.c.b16 %v2338, %v2338
            %v2371 = vpack.c.b16 %v2339, %v2339
            %v2372 = vpack.c.b16 %v2340, %v2340
            %v2373 = vpack.c.b16 %v2341, %v2341
            %v2374 = vpack.c.b16 %v2342, %v2342
            %v2375 = vpack.c.b16 %v2343, %v2343
            %v2376 = vpack.c.b16 %v2344, %v2344
            %v2377 = vpack.c.b16 %v2345, %v2345
            %v2378 = vpack.c.b16 %v2346, %v2346
            %2411 = vst [vmem:[%s206] sm:$0xf] %v2347
            %2412 = vst [vmem:[%s206 + $0x4] sm:$0xf] %v2348
            %2413 = vst [vmem:[%s206 + $0x8] sm:$0xf] %v2349
            %2414 = vst [vmem:[%s206 + $0xc] sm:$0xf] %v2350
            %2415 = vst [vmem:[%s206 + $0x10] sm:$0xf] %v2351
            %2416 = vst [vmem:[%s206 + $0x14] sm:$0xf] %v2352
            %2417 = vst [vmem:[%s206 + $0x18] sm:$0xf] %v2353
            %2418 = vst [vmem:[%s206 + $0x1c] sm:$0xf] %v2354
            %2419 = vst [vmem:[%s206 + $0x20] sm:$0xf] %v2355
            %2420 = vst [vmem:[%s206 + $0x24] sm:$0xf] %v2356
            %2421 = vst [vmem:[%s206 + $0x28] sm:$0xf] %v2357
            %2422 = vst [vmem:[%s206 + $0x2c] sm:$0xf] %v2358
            %2423 = vst [vmem:[%s206 + $0x30] sm:$0xf] %v2359
            %2424 = vst [vmem:[%s206 + $0x34] sm:$0xf] %v2360
            %2425 = vst [vmem:[%s206 + $0x38] sm:$0xf] %v2361
            %2426 = vst [vmem:[%s206 + $0x3c] sm:$0xf] %v2362
            %2427 = vst [vmem:[%s206 + $0x40] sm:$0xf] %v2363
            %2428 = vst [vmem:[%s206 + $0x44] sm:$0xf] %v2364
            %2429 = vst [vmem:[%s206 + $0x48] sm:$0xf] %v2365
            %2430 = vst [vmem:[%s206 + $0x4c] sm:$0xf] %v2366
            %2431 = vst [vmem:[%s206 + $0x50] sm:$0xf] %v2367
            %2432 = vst [vmem:[%s206 + $0x54] sm:$0xf] %v2368
            %2433 = vst [vmem:[%s206 + $0x58] sm:$0xf] %v2369
            %2434 = vst [vmem:[%s206 + $0x5c] sm:$0xf] %v2370
            %2435 = vst [vmem:[%s206 + $0x60] sm:$0xf] %v2371
            %2436 = vst [vmem:[%s206 + $0x64] sm:$0xf] %v2372
            %2437 = vst [vmem:[%s206 + $0x68] sm:$0xf] %v2373
            %2438 = vst [vmem:[%s206 + $0x6c] sm:$0xf] %v2374
            %2439 = vst [vmem:[%s206 + $0x70] sm:$0xf] %v2375
            %2440 = vst [vmem:[%s206 + $0x74] sm:$0xf] %v2376
            %2441 = vst [vmem:[%s206 + $0x78] sm:$0xf] %v2377
            %2442 = vst [vmem:[%s206 + $0x7c] sm:$0xf] %v2378
          $region104: #{tpu_custom_call.1} parent=99 // pred_fallthru
            _
          %p2443 = scmp.ne.s32.totalorder %s213, 0
          // Predicated region
          $region105: #{tpu_custom_call.1} parent=99 // pred_check
            %p2444 = pneg %p2443
          $region106: #{tpu_custom_call.1} parent=99 // pred_check_branch
            %2446 = sbr.rel (%p2444) target = $region108
          $region107: #{tpu_custom_call.1} parent=99 // pred_region
            %v2447 = vpack.c.bf16 %v2117, %v2114
            %v2448 = vpack.c.bf16 %v2125, %v2122
            %v2449 = vpack.c.bf16 %v2133, %v2130
            %v2450 = vpack.c.bf16 %v2141, %v2138
            %v2451 = vpack.c.bf16 %v2149, %v2146
            %v2452 = vpack.c.bf16 %v2157, %v2154
            %v2453 = vpack.c.bf16 %v2165, %v2162
            %v2454 = vpack.c.bf16 %v2173, %v2170
            %v2455 = vpack.c.bf16 %v2181, %v2178
            %v2456 = vpack.c.bf16 %v2189, %v2186
            %v2457 = vpack.c.bf16 %v2197, %v2194
            %v2458 = vpack.c.bf16 %v2205, %v2202
            %v2459 = vpack.c.bf16 %v2213, %v2210
            %v2460 = vpack.c.bf16 %v2221, %v2218
            %v2461 = vpack.c.bf16 %v2229, %v2226
            %v2462 = vpack.c.bf16 %v2237, %v2234
            %v2479 = vunpack.c.l.b16 %v2447
            %v2480 = vunpack.c.h.b16 %v2447
            %v2481 = vunpack.c.l.b16 %v2448
            %v2482 = vunpack.c.h.b16 %v2448
            %v2483 = vunpack.c.l.b16 %v2449
            %v2484 = vunpack.c.h.b16 %v2449
            %v2485 = vunpack.c.l.b16 %v2450
            %v2486 = vunpack.c.h.b16 %v2450
            %v2487 = vunpack.c.l.b16 %v2451
            %v2488 = vunpack.c.h.b16 %v2451
            %v2489 = vunpack.c.l.b16 %v2452
            %v2490 = vunpack.c.h.b16 %v2452
            %v2491 = vunpack.c.l.b16 %v2453
            %v2492 = vunpack.c.h.b16 %v2453
            %v2493 = vunpack.c.l.b16 %v2454
            %v2494 = vunpack.c.h.b16 %v2454
            %v2495 = vunpack.c.l.b16 %v2455
            %v2496 = vunpack.c.h.b16 %v2455
            %v2497 = vunpack.c.l.b16 %v2456
            %v2498 = vunpack.c.h.b16 %v2456
            %v2499 = vunpack.c.l.b16 %v2457
            %v2500 = vunpack.c.h.b16 %v2457
            %v2501 = vunpack.c.l.b16 %v2458
            %v2502 = vunpack.c.h.b16 %v2458
            %v2503 = vunpack.c.l.b16 %v2459
            %v2504 = vunpack.c.h.b16 %v2459
            %v2505 = vunpack.c.l.b16 %v2460
            %v2506 = vunpack.c.h.b16 %v2460
            %v2507 = vunpack.c.l.b16 %v2461
            %v2508 = vunpack.c.h.b16 %v2461
            %v2509 = vunpack.c.l.b16 %v2462
            %v2510 = vunpack.c.h.b16 %v2462
            %v2511 = vpack.c.b16 %v2479, %v2479
            %v2512 = vpack.c.b16 %v2480, %v2480
            %v2513 = vpack.c.b16 %v2481, %v2481
            %v2514 = vpack.c.b16 %v2482, %v2482
            %v2515 = vpack.c.b16 %v2483, %v2483
            %v2516 = vpack.c.b16 %v2484, %v2484
            %v2517 = vpack.c.b16 %v2485, %v2485
            %v2518 = vpack.c.b16 %v2486, %v2486
            %v2519 = vpack.c.b16 %v2487, %v2487
            %v2520 = vpack.c.b16 %v2488, %v2488
            %v2521 = vpack.c.b16 %v2489, %v2489
            %v2522 = vpack.c.b16 %v2490, %v2490
            %v2523 = vpack.c.b16 %v2491, %v2491
            %v2524 = vpack.c.b16 %v2492, %v2492
            %v2525 = vpack.c.b16 %v2493, %v2493
            %v2526 = vpack.c.b16 %v2494, %v2494
            %v2527 = vpack.c.b16 %v2495, %v2495
            %v2528 = vpack.c.b16 %v2496, %v2496
            %v2529 = vpack.c.b16 %v2497, %v2497
            %v2530 = vpack.c.b16 %v2498, %v2498
            %v2531 = vpack.c.b16 %v2499, %v2499
            %v2532 = vpack.c.b16 %v2500, %v2500
            %v2533 = vpack.c.b16 %v2501, %v2501
            %v2534 = vpack.c.b16 %v2502, %v2502
            %v2535 = vpack.c.b16 %v2503, %v2503
            %v2536 = vpack.c.b16 %v2504, %v2504
            %v2537 = vpack.c.b16 %v2505, %v2505
            %v2538 = vpack.c.b16 %v2506, %v2506
            %v2539 = vpack.c.b16 %v2507, %v2507
            %v2540 = vpack.c.b16 %v2508, %v2508
            %v2541 = vpack.c.b16 %v2509, %v2509
            %v2542 = vpack.c.b16 %v2510, %v2510
            %2575 = vst [vmem:[%s206] sm:$0xf] %v2511
            %2576 = vst [vmem:[%s206 + $0x4] sm:$0xf] %v2512
            %2577 = vst [vmem:[%s206 + $0x8] sm:$0xf] %v2513
            %2578 = vst [vmem:[%s206 + $0xc] sm:$0xf] %v2514
            %2579 = vst [vmem:[%s206 + $0x10] sm:$0xf] %v2515
            %2580 = vst [vmem:[%s206 + $0x14] sm:$0xf] %v2516
            %2581 = vst [vmem:[%s206 + $0x18] sm:$0xf] %v2517
            %2582 = vst [vmem:[%s206 + $0x1c] sm:$0xf] %v2518
            %2583 = vst [vmem:[%s206 + $0x20] sm:$0xf] %v2519
            %2584 = vst [vmem:[%s206 + $0x24] sm:$0xf] %v2520
            %2585 = vst [vmem:[%s206 + $0x28] sm:$0xf] %v2521
            %2586 = vst [vmem:[%s206 + $0x2c] sm:$0xf] %v2522
            %2587 = vst [vmem:[%s206 + $0x30] sm:$0xf] %v2523
            %2588 = vst [vmem:[%s206 + $0x34] sm:$0xf] %v2524
            %2589 = vst [vmem:[%s206 + $0x38] sm:$0xf] %v2525
            %2590 = vst [vmem:[%s206 + $0x3c] sm:$0xf] %v2526
            %2591 = vst [vmem:[%s206 + $0x40] sm:$0xf] %v2527
            %2592 = vst [vmem:[%s206 + $0x44] sm:$0xf] %v2528
            %2593 = vst [vmem:[%s206 + $0x48] sm:$0xf] %v2529
            %2594 = vst [vmem:[%s206 + $0x4c] sm:$0xf] %v2530
            %2595 = vst [vmem:[%s206 + $0x50] sm:$0xf] %v2531
            %2596 = vst [vmem:[%s206 + $0x54] sm:$0xf] %v2532
            %2597 = vst [vmem:[%s206 + $0x58] sm:$0xf] %v2533
            %2598 = vst [vmem:[%s206 + $0x5c] sm:$0xf] %v2534
            %2599 = vst [vmem:[%s206 + $0x60] sm:$0xf] %v2535
            %2600 = vst [vmem:[%s206 + $0x64] sm:$0xf] %v2536
            %2601 = vst [vmem:[%s206 + $0x68] sm:$0xf] %v2537
            %2602 = vst [vmem:[%s206 + $0x6c] sm:$0xf] %v2538
            %2603 = vst [vmem:[%s206 + $0x70] sm:$0xf] %v2539
            %2604 = vst [vmem:[%s206 + $0x74] sm:$0xf] %v2540
            %2605 = vst [vmem:[%s206 + $0x78] sm:$0xf] %v2541
            %2606 = vst [vmem:[%s206 + $0x7c] sm:$0xf] %v2542
          $region108: #{tpu_custom_call.1} parent=99 // pred_fallthru
            _
        $region100: #{tpu_custom_call.1} parent=27 // pred_fallthru
          _
        %s2607 = sand.u32 %s111, 1
        %s2608 = scalar_lea.sflag [#allocation10], %s2607
        %s2609 = sand.u32 %s111, 1
        %s2610 = smul.addr %s2609, 128
        %s2611 = scalar_lea.vmem [#allocation11], %s2610
        // Predicated region
        $region109: #{tpu_custom_call.1} parent=27 // pred_check
          %p2612 = pneg %p121
        $region110: #{tpu_custom_call.1} parent=27 // pred_check_branch
          %2614 = sbr.rel (%p2612) target = $region112
        $region111: #{tpu_custom_call.1} parent=27 // pred_region
          %s2615 = smul.u32 32, %s37
          %s2617 = ssub.s32 2048, 2048
          %2618 = vsyncadd %s2608, %s2617
          %s2619 = sadd.s32 %s38, %s2615
          %s2620 = smul.addr %s2619, 64
          %s2621 = scalar_lea.hbm %s6, %s2620
          %s2622 = sshll.u32 %s2611, 4
          %s2623 = int_to_ptr.vmem [resolvable:$true] %s2622
          %2628 = dma.vmem_to_hbm [thread:$0]  %s2623, 2048, %s2621, %s2608, 64, 64, 4
        $region112: #{tpu_custom_call.1} parent=27 // pred_fallthru
          _
      $region28: #{tpu_custom_call.1} parent=5 // pred_fallthru
        _
      %p2629 = scmp.le.s32.totalorder 2, %s28
      // Predicated region
      $region113: #{tpu_custom_call.1} parent=5 // pred_check
        %p2630 = pneg %p2629
      $region114: #{tpu_custom_call.1} parent=5 // pred_check_branch
        %2632 = sbr.rel (%p2630) target = $region116
      $region115: #{tpu_custom_call.1} parent=5 // pred_region
        %s2633 = ssub.s32 %s28, 2
        // Predicated region
        $region117: #{tpu_custom_call.1} parent=115 // pred_check
          %p2634 = pneg %p127
        $region118: #{tpu_custom_call.1} parent=115 // pred_check_branch
          %2636 = sbr.rel (%p2634) target = $region120
        $region119: #{tpu_custom_call.1} parent=115 // pred_region
          %s2637 = sand.u32 %s112, 1
          %s2638 = scalar_lea.sflag [#allocation10], %s2637
          %s2639 = sand.u32 %s112, 1
          %s2640 = smul.addr %s2639, 128
          %s2641 = scalar_lea.vmem [#allocation11], %s2640
          %2642 = dma.done %s2638, 2048
        $region120: #{tpu_custom_call.1} parent=115 // pred_fallthru
          _
      $region116: #{tpu_custom_call.1} parent=5 // pred_fallthru
        _
    $region6: #{tpu_custom_call.1} parent=1 // loop_footer
      %s32 = sadd.s32 1, %s28
    $region7: #{tpu_custom_call.1} parent=1 // loop_footer_branch
      %27 = sbr.rel target = $region3
    $region8: #{tpu_custom_call.1} parent=1 // loop_exit
      _
    %2643 = vsyncpa [#allocation9], 1
    %s2644 = scalar_lea.sflag [#allocation9], 1
    %2645 = vsyncpa %s2644, 1
    %2646 = vsyncpa [#allocation10], 1
    %s2647 = scalar_lea.sflag [#allocation10], 1
    %2648 = vsyncpa %s2647, 1
  %2649 = vsyncmov [#allocation3]
  %s2650 = vpop.sfrf %2649
  %p2651 = scmp.eq.s32.totalorder %s2650, 0
  %p2652 = pneg %p2651
  %2654 = shalt.err (%p2652)
  %s2655 = scalar_lea.sflag [#allocation3], 1
  %2656 = vsyncmov %s2655
  %s2657 = vpop.sfrf %2656
  %p2658 = scmp.eq.s32.totalorder %s2657, 0
  %p2659 = pneg %p2658
  %2661 = shalt.err (%p2659)

</llo_original>
